<compile_context>
chip_gen: v7x
topology: tpu7x:2x2x1
jax: 0.10.0
libtpu: 0.0.40
codegen_flags: <defaults>
</compile_context>

<pallas_src>
import functools

import jax
import jax.numpy as jnp
from jax.experimental import pallas as pl
from jax.experimental.pallas import tpu as pltpu

EPS = 1e-5  # PyTorch BatchNorm1d default eps


# --------------------------------------------------------------------------- kernels
def _z1_stats_kernel(h_ref, w1_ref, stats_ref):
    """Stats-only pass: z1 = h @ W1 (bf16 in, f32 acc); per-tile column sum / sum-of-sq."""
    z1 = jnp.dot(h_ref[...], w1_ref[...], preferred_element_type=jnp.float32)
    zsum = jnp.sum(z1, axis=0, keepdims=True)
    zsq = jnp.sum(z1 * z1, axis=0, keepdims=True)
    stats_ref[...] = jnp.concatenate([zsum, zsq], axis=0)[None]          # (1, 2, hid)


def _fused_bn1_relu_mm_kernel(h_ref, w1_ref, sc1_ref, sh1_ref, w2_ref,
                              z2_ref, stats_ref):
    """Recompute z1 = h@W1; a1 = ReLU(z1*scale1+shift1); z2 = a1@W2; emit z2 + BN2 stats."""
    z1 = jnp.dot(h_ref[...], w1_ref[...], preferred_element_type=jnp.float32)
    a1 = jnp.maximum(z1 * sc1_ref[...] + sh1_ref[...], 0.0)
    z2 = jnp.dot(a1.astype(w2_ref.dtype), w2_ref[...],
                 preferred_element_type=jnp.float32)
    z2_ref[...] = z2.astype(z2_ref.dtype)
    zsum = jnp.sum(z2, axis=0, keepdims=True)
    zsq = jnp.sum(z2 * z2, axis=0, keepdims=True)
    stats_ref[...] = jnp.concatenate([zsum, zsq], axis=0)[None]          # (1, 2, out)


def _bn_relu_kernel(z_ref, sc_ref, sh_ref, o_ref):
    z = z_ref[...].astype(jnp.float32) * sc_ref[...] + sh_ref[...]
    o_ref[...] = jnp.maximum(z, 0.0).astype(o_ref.dtype)


# --------------------------------------------------------------------------- wrappers
def _z1_stats(h, w1, tile_n):
    n_pad, in_dim = h.shape
    hid = w1.shape[1]
    grid = n_pad // tile_n
    cost = pl.CostEstimate(
        flops=2 * n_pad * in_dim * hid, transcendentals=0,
        bytes_accessed=n_pad * in_dim * 2 + in_dim * hid * 2 + grid * 2 * hid * 4)
    return pl.pallas_call(
        _z1_stats_kernel,
        out_shape=jax.ShapeDtypeStruct((grid, 2, hid), jnp.float32),
        grid_spec=pltpu.PrefetchScalarGridSpec(
            num_scalar_prefetch=0,
            grid=(grid,),
            in_specs=[
                pl.BlockSpec((tile_n, in_dim), lambda i: (i, 0)),  # streamed row tile
                pl.BlockSpec((in_dim, hid), lambda i: (0, 0)),     # W1: VMEM-resident
            ],
            out_specs=pl.BlockSpec((1, 2, hid), lambda i: (i, 0, 0))),
        compiler_params=pltpu.CompilerParams(dimension_semantics=("parallel",)),
        cost_estimate=cost,
    )(h, w1)


def _fused_pass(h, w1, scale1, shift1, w2, tile_n):
    n_pad, in_dim = h.shape
    hid = w1.shape[1]
    out_dim = w2.shape[1]
    grid = n_pad // tile_n
    cost = pl.CostEstimate(
        flops=2 * n_pad * in_dim * hid + 2 * n_pad * hid * out_dim + 3 * n_pad * hid,
        transcendentals=0,
        bytes_accessed=(n_pad * in_dim * 2 + in_dim * hid * 2 + 2 * hid * 4
                        + hid * out_dim * 2 + n_pad * out_dim * 2
                        + grid * 2 * out_dim * 4))
    return pl.pallas_call(
        _fused_bn1_relu_mm_kernel,
        out_shape=(jax.ShapeDtypeStruct((n_pad, out_dim), jnp.bfloat16),
                   jax.ShapeDtypeStruct((grid, 2, out_dim), jnp.float32)),
        grid_spec=pltpu.PrefetchScalarGridSpec(
            num_scalar_prefetch=0,
            grid=(grid,),
            in_specs=[
                pl.BlockSpec((tile_n, in_dim), lambda i: (i, 0)),  # streamed row tile
                pl.BlockSpec((in_dim, hid), lambda i: (0, 0)),     # W1: VMEM-resident
                pl.BlockSpec((1, hid), lambda i: (0, 0)),          # folded BN1 scale
                pl.BlockSpec((1, hid), lambda i: (0, 0)),          # folded BN1 shift
                pl.BlockSpec((hid, out_dim), lambda i: (0, 0)),    # W2: VMEM-resident
            ],
            out_specs=[
                pl.BlockSpec((tile_n, out_dim), lambda i: (i, 0)),
                pl.BlockSpec((1, 2, out_dim), lambda i: (i, 0, 0)),
            ]),
        compiler_params=pltpu.CompilerParams(dimension_semantics=("parallel",)),
        cost_estimate=cost,
    )(h, w1, scale1, shift1, w2)


def _bn_relu(z, scale, shift, tile_n, out_dtype):
    n_pad, d = z.shape
    grid = n_pad // tile_n
    return pl.pallas_call(
        _bn_relu_kernel,
        out_shape=jax.ShapeDtypeStruct((n_pad, d), out_dtype),
        grid_spec=pltpu.PrefetchScalarGridSpec(
            num_scalar_prefetch=0,
            grid=(grid,),
            in_specs=[
                pl.BlockSpec((tile_n, d), lambda i: (i, 0)),
                pl.BlockSpec((1, d), lambda i: (0, 0)),
                pl.BlockSpec((1, d), lambda i: (0, 0)),
            ],
            out_specs=pl.BlockSpec((tile_n, d), lambda i: (i, 0))),
        compiler_params=pltpu.CompilerParams(dimension_semantics=("parallel",)),
    )(z, scale, shift)


def _fold_bn(col_sum, col_sq, n, gamma, beta):
    """Full-batch column sum / sum-of-squares -> folded BN (scale, shift) vectors."""
    mu = col_sum / n
    var = jnp.maximum(col_sq / n - mu * mu, 0.0)   # biased variance (training-mode BN)
    scale = gamma * jax.lax.rsqrt(var + EPS)
    shift = beta - mu * scale
    return scale, shift


def _pick_tile_n(n):
    """Largest tile in {1024, 512, 256} keeping >=4 grid steps when possible.

    >=256 fills the 256-wide MXU M dimension on v6e/v7x; >=2 grid steps keep both v7x
    TensorCores busy and give the BlockSpec pipeline something to overlap.
    """
    tile = 1024
    while tile > 256 and -(-n // tile) < 4:
        tile //= 2
    return tile


@functools.partial(jax.jit, static_argnames=("tile_n", "out_dtype"))
def apply_node_func(h, w1, b1, g1, be1, w2, b2, g2, be2, *,
                    tile_n=None, out_dtype=jnp.float32):
    """ApplyNodeFunc forward: ReLU(BN2(ReLU(BN1(h @ W1 + b1)) @ W2 + b2)), batch stats.

    b1/b2 are accepted for interface parity with the PyTorch module but never shipped
    to the TPU: a per-column bias added right before a BatchNorm over the node axis is
    exactly cancelled by the mean subtraction.  Pass out_dtype=jnp.bfloat16 if the
    consumer accepts it (halves the final pass's HBM writeback).
    """
    del b1, b2
    n, in_dim = h.shape
    hid = w1.shape[1]
    out_dim = w2.shape[1]
    if in_dim % 128 or hid % 128 or out_dim % 128:
        raise ValueError("feature dims must be multiples of 128 lanes "
                         "(zero-pad features/weights outside this kernel)")
    if tile_n is None:
        tile_n = _pick_tile_n(n)
    n_pad = -(-n // tile_n) * tile_n
    pad_rows = n_pad - n

    h16 = h.astype(jnp.bfloat16)
    if pad_rows:
        # Zero rows + dropped biases => padded rows contribute exactly 0 to the BN1 sums;
        # their (constant) contribution to the BN2 sums is removed analytically below.
        h16 = jnp.pad(h16, ((0, pad_rows), (0, 0)))

    w1_16 = w1.astype(jnp.bfloat16)
    w2_16 = w2.astype(jnp.bfloat16)
    g1 = g1.reshape(1, hid).astype(jnp.float32)
    be1 = be1.reshape(1, hid).astype(jnp.float32)
    g2 = g2.reshape(1, out_dim).astype(jnp.float32)
    be2 = be2.reshape(1, out_dim).astype(jnp.float32)

    # Pass 1 (stats only): per-tile column sum / sumsq of z1 = h @ W1.  z1 itself never
    # touches HBM -- it is recomputed in pass 2 (the MXU is idle in this mem-bound regime).
    stats1 = _z1_stats(h16, w1_16, tile_n)
    s1 = stats1.sum(axis=0)                                    # (2, hid)
    scale1, shift1 = _fold_bn(s1[0:1], s1[1:2], n, g1, be1)

    # Pass 2 (fused): recompute z1 -> BN1 -> ReLU -> z2 = a1 @ W2, + per-tile BN2 stats.
    z2, stats2 = _fused_pass(h16, w1_16, scale1, shift1, w2_16, tile_n)
    s2 = stats2.sum(axis=0)                                    # (2, out_dim)
    sum2, sq2 = s2[0:1], s2[1:2]
    if pad_rows:
        # Every padded row has z1 = 0 -> a1 = ReLU(shift1) -> z2 = ReLU(shift1) @ W2.
        # Subtract that constant row's contribution to the BN2 statistics here (a tiny
        # (1, out_dim) XLA computation) instead of masking inside the kernel.
        r = jnp.dot(jnp.maximum(shift1, 0.0).astype(jnp.bfloat16), w2_16,
                    preferred_element_type=jnp.float32)
        sum2 = sum2 - pad_rows * r
        sq2 = sq2 - pad_rows * (r * r)
    scale2, shift2 = _fold_bn(sum2, sq2, n, g2, be2)

    # Pass 3: out = ReLU(BN2(z2)).
    out = _bn_relu(z2, scale2, shift2, tile_n, out_dtype)
    return out[:n]


if __name__ == "__main__":
    # Small but lane-dense problem: 500 nodes (exercises row padding + the analytic
    # padded-row stats correction; tile_n auto-picks 256 -> grid=2),
    # in=128, hidden=256 (MXU-aligned for v6e/v7x), out=128.
    N, IN, HID, OUT = 500, 128, 256, 128
    key = jax.random.PRNGKey(0)
    ks = jax.random.split(key, 9)

    h = jax.random.normal(ks[0], (N, IN), dtype=jnp.float32)

    # PyTorch-style Linear init (weights stored as (in, out) for x @ W).
    lim1 = 1.0 / (IN ** 0.5)
    w1 = jax.random.uniform(ks[1], (IN, HID), jnp.float32, -lim1, lim1)
    b1 = jax.random.uniform(ks[2], (1, HID), jnp.float32, -lim1, lim1)
    lim2 = 1.0 / (HID ** 0.5)
    w2 = jax.random.uniform(ks[3], (HID, OUT), jnp.float32, -lim2, lim2)
    b2 = jax.random.uniform(ks[4], (1, OUT), jnp.float32, -lim2, lim2)

    # Non-trivial BN affine params to exercise the scale/shift fold.
    g1 = 1.0 + 0.1 * jax.random.normal(ks[5], (1, HID), jnp.float32)
    be1 = 0.1 * jax.random.normal(ks[6], (1, HID), jnp.float32)
    g2 = 1.0 + 0.1 * jax.random.normal(ks[7], (1, OUT), jnp.float32)
    be2 = 0.1 * jax.random.normal(ks[8], (1, OUT), jnp.float32)

    out = apply_node_func(h, w1, b1, g1, be1, w2, b2, g2, be2)
    out = jax.block_until_ready(out)

    # Pure-f32 reference with the exact PyTorch forward semantics (biases included).
    def bn(x, g, b):
        mu = x.mean(0, keepdims=True)
        var = ((x - mu) ** 2).mean(0, keepdims=True)
        return (x - mu) * jax.lax.rsqrt(var + EPS) * g + b

    z1 = h @ w1 + b1
    a1 = jnp.maximum(bn(z1, g1, be1), 0.0)
    z2 = a1 @ w2 + b2
    ref = jnp.maximum(bn(z2, g2, be2), 0.0)

    # Dropping the pre-BN biases and the analytic padded-row correction are algebraically
    # exact; the tolerance covers bf16 MXU inputs / bf16 z2 storage (mixed precision).
    err = float(jnp.max(jnp.abs(out - ref)))
    assert out.shape == ref.shape
    assert jnp.allclose(out, ref, atol=5e-2, rtol=5e-2), \
        f"mismatch vs reference (max abs err {err})"

    print("KERNEL_OK")
</pallas_src>

<mosaic_0001>
module attributes {stable_mosaic.version = 11 : i64} {
  func.func @_z1_stats_kernel(%arg0: i32, %arg1: memref<256x128xbf16, #tpu.memory_space<vmem>>, %arg2: memref<128x256xbf16, #tpu.memory_space<vmem>>, %arg3: memref<1x2x256xf32, #tpu.memory_space<vmem>>) attributes {dimension_semantics = [#tpu.dimension_semantics<parallel>], iteration_bounds = array<i64: 2>, scalar_prefetch = 0 : i64, scratch_operands = 0 : i64, tpu.core_type = #tpu.core_type<tc>, window_params = [{transform_indices = @transform_0, window_bounds = array<i64: 256, 128>}, {pipeline_mode = #tpu.pipeline_mode<synchronous>, transform_indices = @transform_1, window_bounds = array<i64: 128, 256>}, {transform_indices = @transform_2, window_bounds = array<i64: 1, 2, 256>}]} {
    %c0 = arith.constant 0 : index
    %c0_0 = arith.constant 0 : index
    %0 = vector.load %arg1[%c0, %c0_0] : memref<256x128xbf16, #tpu.memory_space<vmem>>, vector<256x128xbf16>
    %c0_1 = arith.constant 0 : index
    %c0_2 = arith.constant 0 : index
    %1 = vector.load %arg2[%c0_1, %c0_2] : memref<128x256xbf16, #tpu.memory_space<vmem>>, vector<128x256xbf16>
    %cst = arith.constant dense<0.000000e+00> : vector<256x256xf32>
    %2 = tpu.matmul %0, %1, %cst {dimension_numbers = #tpu.dot_dimension_numbers<[1], [0], [0], [1], [0, 0, 1, 1], [], []>} : vector<256x128xbf16>, vector<128x256xbf16>, vector<256x256xf32> -> vector<256x256xf32>
    %cst_3 = arith.constant dense<0.000000e+00> : vector<256xf32>
    %3 = vector.multi_reduction <add>, %2, %cst_3 [0] : vector<256x256xf32> to vector<256xf32>
    %4 = vector.shape_cast %3 : vector<256xf32> to vector<1x256xf32>
    %5 = arith.mulf %2, %2 : vector<256x256xf32>
    %cst_4 = arith.constant dense<0.000000e+00> : vector<256xf32>
    %6 = vector.multi_reduction <add>, %5, %cst_4 [0] : vector<256x256xf32> to vector<256xf32>
    %7 = vector.shape_cast %6 : vector<256xf32> to vector<1x256xf32>
    %8 = tpu.concatenate %4, %7 in 0 : vector<1x256xf32>, vector<1x256xf32> -> vector<2x256xf32>
    %9 = vector.shape_cast %8 : vector<2x256xf32> to vector<1x2x256xf32>
    %c0_5 = arith.constant 0 : index
    %c0_6 = arith.constant 0 : index
    %c0_7 = arith.constant 0 : index
    %10 = vector.load %arg3[%c0_5, %c0_6, %c0_7] : memref<1x2x256xf32, #tpu.memory_space<vmem>>, vector<1x2x256xf32>
    tpu.vector_store %arg3[%c0_5, %c0_6, %c0_7], %9 {strides = array<i32>} : memref<1x2x256xf32, #tpu.memory_space<vmem>>, vector<1x2x256xf32>,
    return
  }
  func.func @transform_0(%arg0: i32) -> (i32, i32) {
    %c0_i32 = arith.constant 0 : i32
    %c0_i32_0 = arith.constant 0 : i32
    return %arg0, %c0_i32 : i32, i32
  }
  func.func @transform_1(%arg0: i32) -> (i32, i32) {
    %c0_i32 = arith.constant 0 : i32
    %c0_i32_0 = arith.constant 0 : i32
    %c0_i32_1 = arith.constant 0 : i32
    return %c0_i32, %c0_i32_0 : i32, i32
  }
  func.func @transform_2(%arg0: i32) -> (i32, i32, i32) {
    %c0_i32 = arith.constant 0 : i32
    %c0_i32_0 = arith.constant 0 : i32
    %c0_i32_1 = arith.constant 0 : i32
    return %arg0, %c0_i32, %c0_i32_0 : i32, i32, i32
  }
}

module attributes {stable_mosaic.version = 11 : i64} {
  func.func @_fused_bn1_relu_mm_kernel(%arg0: i32, %arg1: memref<256x128xbf16, #tpu.memory_space<vmem>>, %arg2: memref<128x256xbf16, #tpu.memory_space<vmem>>, %arg3: memref<1x256xf32, #tpu.memory_space<vmem>>, %arg4: memref<1x256xf32, #tpu.memory_space<vmem>>, %arg5: memref<256x128xbf16, #tpu.memory_space<vmem>>, %arg6: memref<256x128xbf16, #tpu.memory_space<vmem>>, %arg7: memref<1x2x128xf32, #tpu.memory_space<vmem>>) attributes {dimension_semantics = [#tpu.dimension_semantics<parallel>], iteration_bounds = array<i64: 2>, scalar_prefetch = 0 : i64, scratch_operands = 0 : i64, tpu.core_type = #tpu.core_type<tc>, window_params = [{transform_indices = @transform_0, window_bounds = array<i64: 256, 128>}, {pipeline_mode = #tpu.pipeline_mode<synchronous>, transform_indices = @transform_1, window_bounds = array<i64: 128, 256>}, {pipeline_mode = #tpu.pipeline_mode<synchronous>, transform_indices = @transform_2, window_bounds = array<i64: 1, 256>}, {pipeline_mode = #tpu.pipeline_mode<synchronous>, transform_indices = @transform_3, window_bounds = array<i64: 1, 256>}, {pipeline_mode = #tpu.pipeline_mode<synchronous>, transform_indices = @transform_4, window_bounds = array<i64: 256, 128>}, {transform_indices = @transform_5, window_bounds = array<i64: 256, 128>}, {transform_indices = @transform_6, window_bounds = array<i64: 1, 2, 128>}]} {
    %c0 = arith.constant 0 : index
    %c0_0 = arith.constant 0 : index
    %0 = vector.load %arg1[%c0, %c0_0] : memref<256x128xbf16, #tpu.memory_space<vmem>>, vector<256x128xbf16>
    %c0_1 = arith.constant 0 : index
    %c0_2 = arith.constant 0 : index
    %1 = vector.load %arg2[%c0_1, %c0_2] : memref<128x256xbf16, #tpu.memory_space<vmem>>, vector<128x256xbf16>
    %cst = arith.constant dense<0.000000e+00> : vector<256x256xf32>
    %2 = tpu.matmul %0, %1, %cst {dimension_numbers = #tpu.dot_dimension_numbers<[1], [0], [0], [1], [0, 0, 1, 1], [], []>} : vector<256x128xbf16>, vector<128x256xbf16>, vector<256x256xf32> -> vector<256x256xf32>
    %c0_3 = arith.constant 0 : index
    %c0_4 = arith.constant 0 : index
    %3 = vector.load %arg3[%c0_3, %c0_4] : memref<1x256xf32, #tpu.memory_space<vmem>>, vector<1x256xf32>
    %4 = vector.broadcast %3 : vector<1x256xf32> to vector<256x256xf32>
    %5 = arith.mulf %2, %4 : vector<256x256xf32>
    %c0_5 = arith.constant 0 : index
    %c0_6 = arith.constant 0 : index
    %6 = vector.load %arg4[%c0_5, %c0_6] : memref<1x256xf32, #tpu.memory_space<vmem>>, vector<1x256xf32>
    %7 = vector.broadcast %6 : vector<1x256xf32> to vector<256x256xf32>
    %8 = arith.addf %5, %7 : vector<256x256xf32>
    %cst_7 = arith.constant 0.000000e+00 : f32
    %9 = vector.broadcast %cst_7 : f32 to vector<256x256xf32>
    %10 = arith.maximumf %8, %9 : vector<256x256xf32>
    %11 = arith.truncf %10 : vector<256x256xf32> to vector<256x256xbf16>
    %c0_8 = arith.constant 0 : index
    %c0_9 = arith.constant 0 : index
    %12 = vector.load %arg5[%c0_8, %c0_9] : memref<256x128xbf16, #tpu.memory_space<vmem>>, vector<256x128xbf16>
    %cst_10 = arith.constant dense<0.000000e+00> : vector<256x128xf32>
    %13 = tpu.matmul %11, %12, %cst_10 {dimension_numbers = #tpu.dot_dimension_numbers<[1], [0], [0], [1], [0, 0, 1, 1], [], []>} : vector<256x256xbf16>, vector<256x128xbf16>, vector<256x128xf32> -> vector<256x128xf32>
    %14 = arith.truncf %13 : vector<256x128xf32> to vector<256x128xbf16>
    %c0_11 = arith.constant 0 : index
    %c0_12 = arith.constant 0 : index
    %15 = vector.load %arg6[%c0_11, %c0_12] : memref<256x128xbf16, #tpu.memory_space<vmem>>, vector<256x128xbf16>
    tpu.vector_store %arg6[%c0_11, %c0_12], %14 {strides = array<i32>} : memref<256x128xbf16, #tpu.memory_space<vmem>>, vector<256x128xbf16>,
    %cst_13 = arith.constant dense<0.000000e+00> : vector<128xf32>
    %16 = vector.multi_reduction <add>, %13, %cst_13 [0] : vector<256x128xf32> to vector<128xf32>
    %17 = vector.shape_cast %16 : vector<128xf32> to vector<1x128xf32>
    %18 = arith.mulf %13, %13 : vector<256x128xf32>
    %cst_14 = arith.constant dense<0.000000e+00> : vector<128xf32>
    %19 = vector.multi_reduction <add>, %18, %cst_14 [0] : vector<256x128xf32> to vector<128xf32>
    %20 = vector.shape_cast %19 : vector<128xf32> to vector<1x128xf32>
    %21 = tpu.concatenate %17, %20 in 0 : vector<1x128xf32>, vector<1x128xf32> -> vector<2x128xf32>
    %22 = vector.shape_cast %21 : vector<2x128xf32> to vector<1x2x128xf32>
    %c0_15 = arith.constant 0 : index
    %c0_16 = arith.constant 0 : index
    %c0_17 = arith.constant 0 : index
    %23 = vector.load %arg7[%c0_15, %c0_16, %c0_17] : memref<1x2x128xf32, #tpu.memory_space<vmem>>, vector<1x2x128xf32>
    tpu.vector_store %arg7[%c0_15, %c0_16, %c0_17], %22 {strides = array<i32>} : memref<1x2x128xf32, #tpu.memory_space<vmem>>, vector<1x2x128xf32>,
    return
  }
  func.func @transform_0(%arg0: i32) -> (i32, i32) {
    %c0_i32 = arith.constant 0 : i32
    %c0_i32_0 = arith.constant 0 : i32
    return %arg0, %c0_i32 : i32, i32
  }
  func.func @transform_1(%arg0: i32) -> (i32, i32) {
    %c0_i32 = arith.constant 0 : i32
    %c0_i32_0 = arith.constant 0 : i32
    %c0_i32_1 = arith.constant 0 : i32
    return %c0_i32, %c0_i32_0 : i32, i32
  }
  func.func @transform_2(%arg0: i32) -> (i32, i32) {
    %c0_i32 = arith.constant 0 : i32
    %c0_i32_0 = arith.constant 0 : i32
    %c0_i32_1 = arith.constant 0 : i32
    return %c0_i32, %c0_i32_0 : i32, i32
  }
  func.func @transform_3(%arg0: i32) -> (i32, i32) {
    %c0_i32 = arith.constant 0 : i32
    %c0_i32_0 = arith.constant 0 : i32
    %c0_i32_1 = arith.constant 0 : i32
    return %c0_i32, %c0_i32_0 : i32, i32
  }
  func.func @transform_4(%arg0: i32) -> (i32, i32) {
    %c0_i32 = arith.constant 0 : i32
    %c0_i32_0 = arith.constant 0 : i32
    %c0_i32_1 = arith.constant 0 : i32
    return %c0_i32, %c0_i32_0 : i32, i32
  }
  func.func @transform_5(%arg0: i32) -> (i32, i32) {
    %c0_i32 = arith.constant 0 : i32
    %c0_i32_0 = arith.constant 0 : i32
    return %arg0, %c0_i32 : i32, i32
  }
  func.func @transform_6(%arg0: i32) -> (i32, i32, i32) {
    %c0_i32 = arith.constant 0 : i32
    %c0_i32_0 = arith.constant 0 : i32
    %c0_i32_1 = arith.constant 0 : i32
    return %arg0, %c0_i32, %c0_i32_0 : i32, i32, i32
  }
}

module attributes {stable_mosaic.version = 11 : i64} {
  func.func @_bn_relu_kernel(%arg0: i32, %arg1: memref<256x128xbf16, #tpu.memory_space<vmem>>, %arg2: memref<1x128xf32, #tpu.memory_space<vmem>>, %arg3: memref<1x128xf32, #tpu.memory_space<vmem>>, %arg4: memref<256x128xf32, #tpu.memory_space<vmem>>) attributes {dimension_semantics = [#tpu.dimension_semantics<parallel>], iteration_bounds = array<i64: 2>, scalar_prefetch = 0 : i64, scratch_operands = 0 : i64, tpu.core_type = #tpu.core_type<tc>, window_params = [{transform_indices = @transform_0, window_bounds = array<i64: 256, 128>}, {pipeline_mode = #tpu.pipeline_mode<synchronous>, transform_indices = @transform_1, window_bounds = array<i64: 1, 128>}, {pipeline_mode = #tpu.pipeline_mode<synchronous>, transform_indices = @transform_2, window_bounds = array<i64: 1, 128>}, {transform_indices = @transform_3, window_bounds = array<i64: 256, 128>}]} {
    %c0 = arith.constant 0 : index
    %c0_0 = arith.constant 0 : index
    %0 = vector.load %arg1[%c0, %c0_0] : memref<256x128xbf16, #tpu.memory_space<vmem>>, vector<256x128xbf16>
    %1 = arith.extf %0 : vector<256x128xbf16> to vector<256x128xf32>
    %c0_1 = arith.constant 0 : index
    %c0_2 = arith.constant 0 : index
    %2 = vector.load %arg2[%c0_1, %c0_2] : memref<1x128xf32, #tpu.memory_space<vmem>>, vector<1x128xf32>
    %3 = vector.broadcast %2 : vector<1x128xf32> to vector<256x128xf32>
    %4 = arith.mulf %1, %3 : vector<256x128xf32>
    %c0_3 = arith.constant 0 : index
    %c0_4 = arith.constant 0 : index
    %5 = vector.load %arg3[%c0_3, %c0_4] : memref<1x128xf32, #tpu.memory_space<vmem>>, vector<1x128xf32>
    %6 = vector.broadcast %5 : vector<1x128xf32> to vector<256x128xf32>
    %7 = arith.addf %4, %6 : vector<256x128xf32>
    %cst = arith.constant 0.000000e+00 : f32
    %8 = vector.broadcast %cst : f32 to vector<256x128xf32>
    %9 = arith.maximumf %7, %8 : vector<256x128xf32>
    %c0_5 = arith.constant 0 : index
    %c0_6 = arith.constant 0 : index
    %10 = vector.load %arg4[%c0_5, %c0_6] : memref<256x128xf32, #tpu.memory_space<vmem>>, vector<256x128xf32>
    tpu.vector_store %arg4[%c0_5, %c0_6], %9 {strides = array<i32>} : memref<256x128xf32, #tpu.memory_space<vmem>>, vector<256x128xf32>,
    return
  }
  func.func @transform_0(%arg0: i32) -> (i32, i32) {
    %c0_i32 = arith.constant 0 : i32
    %c0_i32_0 = arith.constant 0 : i32
    return %arg0, %c0_i32 : i32, i32
  }
  func.func @transform_1(%arg0: i32) -> (i32, i32) {
    %c0_i32 = arith.constant 0 : i32
    %c0_i32_0 = arith.constant 0 : i32
    %c0_i32_1 = arith.constant 0 : i32
    return %c0_i32, %c0_i32_0 : i32, i32
  }
  func.func @transform_2(%arg0: i32) -> (i32, i32) {
    %c0_i32 = arith.constant 0 : i32
    %c0_i32_0 = arith.constant 0 : i32
    %c0_i32_1 = arith.constant 0 : i32
    return %c0_i32, %c0_i32_0 : i32, i32
  }
  func.func @transform_3(%arg0: i32) -> (i32, i32) {
    %c0_i32 = arith.constant 0 : i32
    %c0_i32_0 = arith.constant 0 : i32
    return %arg0, %c0_i32 : i32, i32
  }
}

</mosaic_0001>

<llo_original>
// kernel: apply_node_func.3
$region0: #{apply_node_func.3}
  #allocation0 [shape = 'u32[]', space=smem, size = 0x4, offset = 0x4, fixed_abs, tag = 'smem constant byte address 0x4 - core index']
  #allocation1 [shape = 'u32[144,128]{1,0:T(1,128)}', space=vmem, size = 0x12000, scoped, tag = 'internal scratch']
  %s0 = inlined_call_operand.vmem [shape: bf16[512,128], index: 0, kind: input, shape index: {}]
  %s1 = inlined_call_operand.vmem [shape: bf16[128,256], index: 1, kind: input, shape index: {}]
  %s2 = inlined_call_operand.vmem [shape: f32[2,2,256], index: 2, kind: output, shape index: {}]
  %s3 = sld [smem:[#allocation0]]
  $region41: #{apply_node_func.3} parent=0
    _
  %s5 = ssub.s32 1, %s3
  %s6 = scalar_select 0, %s5, %s3
  loop: start=0, step=1, limit=4
  $region2: #{apply_node_func.3} parent=0 // loop_pre_header
    _
  $region3: #{apply_node_func.3} parent=0 // loop_header
    %s8 = sphi 0, %s12
    %p9 = scmp.ge.s32.totalorder %s8, 4
    %s18 = sphi 0, %s20
    %s21 = sphi 0, %s18
    %s22 = sphi 0, %s21
    %s38 = sphi 0, %s22
    %s42 = sphi 0, %s42
    %s44 = sphi 0, %s42
    %s45 = sphi 0, %s44
    %s59 = sphi 0, %s45
    %s65 = sphi 0, %s67
    %s68 = sphi 0, %s65
    %s69 = sphi 0, %s68
    %s85 = sphi 0, %s69
  $region4: #{apply_node_func.3} parent=0 // loop_header_branch
    %11 = sbr.rel (%p9) target = $region8
  $region5: #{apply_node_func.3} parent=0 // loop_body
    %s13 = ssub.s32 %s8, 1
    %s14 = ssub.s32 %s8, 2
    %s15 = sadd.s32 %s8, 1
    %s16 = ssub.s32 %s8, %s15
    %p17 = scmp.eq.s32.totalorder %s16, 0
    %s19 = sadd.s32 %s18, 1
    %s20 = scalar_select %p17, %s18, %s19
    %p23 = pneg %p17
    %p24 = scmp.eq.s32.totalorder %s8, 1
    %p25 = por %p23, %p24
    %p26 = scmp.ne.s32.totalorder %s18, %s21
    %p27 = scmp.eq.s32.totalorder %s8, 0
    %p28 = por %p26, %p27
    %p29 = scmp.ne.s32.totalorder %s18, %s21
    %p30 = scmp.eq.s32.totalorder %s13, 1
    %p31 = por %p29, %p30
    %p32 = scmp.ne.s32.totalorder %s21, %s22
    %p33 = scmp.eq.s32.totalorder %s13, 0
    %p34 = por %p32, %p33
    %p35 = scmp.ne.s32.totalorder %s21, %s22
    %p36 = scmp.eq.s32.totalorder %s14, 1
    %p37 = por %p35, %p36
    %p39 = scmp.ne.s32.totalorder %s22, %s38
    %p40 = scmp.eq.s32.totalorder %s14, 0
    %p41 = por %p39, %p40
    %s43 = sadd.s32 %s42, 1
    %p46 = scmp.eq.s32.totalorder %s8, 1
    %p47 = scmp.ne.s32.totalorder %s42, %s44
    %p48 = scmp.eq.s32.totalorder %s8, 0
    %p49 = por %p47, %p48
    %p50 = scmp.ne.s32.totalorder %s42, %s44
    %p51 = scmp.eq.s32.totalorder %s13, 1
    %p52 = por %p50, %p51
    %p53 = scmp.ne.s32.totalorder %s44, %s45
    %p54 = scmp.eq.s32.totalorder %s13, 0
    %p55 = por %p53, %p54
    %p56 = scmp.ne.s32.totalorder %s44, %s45
    %p57 = scmp.eq.s32.totalorder %s14, 1
    %p58 = por %p56, %p57
    %p60 = scmp.ne.s32.totalorder %s45, %s59
    %p61 = scmp.eq.s32.totalorder %s14, 0
    %p62 = por %p60, %p61
    %s63 = ssub.s32 %s8, %s15
    %p64 = scmp.eq.s32.totalorder %s63, 0
    %s66 = sadd.s32 %s65, 1
    %s67 = scalar_select %p64, %s65, %s66
    %p70 = pneg %p64
    %p71 = scmp.eq.s32.totalorder %s8, 1
    %p72 = por %p70, %p71
    %p73 = scmp.ne.s32.totalorder %s65, %s68
    %p74 = scmp.eq.s32.totalorder %s8, 0
    %p75 = por %p73, %p74
    %p76 = scmp.ne.s32.totalorder %s65, %s68
    %p77 = scmp.eq.s32.totalorder %s13, 1
    %p78 = por %p76, %p77
    %p79 = scmp.ne.s32.totalorder %s68, %s69
    %p80 = scmp.eq.s32.totalorder %s13, 0
    %p81 = por %p79, %p80
    %p82 = scmp.ne.s32.totalorder %s68, %s69
    %p83 = scmp.eq.s32.totalorder %s14, 1
    %p84 = por %p82, %p83
    %p86 = scmp.ne.s32.totalorder %s69, %s85
    %p87 = scmp.eq.s32.totalorder %s14, 0
    %p88 = por %p86, %p87
    %p89 = scmp.le.s32.totalorder 1, %s8
    %p90 = scmp.lt.s32.totalorder %s8, 3
    %p91 = pnand %p89, %p90
    %p92 = pneg %p91
    // Predicated region
    $region9: #{apply_node_func.3} parent=5 // pred_check
      _
    $region10: #{apply_node_func.3} parent=5 // pred_check_branch
      %94 = sbr.rel (%p91) target = $region12
    $region11: #{apply_node_func.3} parent=5 // pred_region
      %s95 = ssub.s32 %s8, 1
      // Predicated region
      $region13: #{apply_node_func.3} parent=11 // pred_check
        %p96 = pneg %p55
      $region14: #{apply_node_func.3} parent=11 // pred_check_branch
        %98 = sbr.rel (%p96) target = $region16
      $region15: #{apply_node_func.3} parent=11 // pred_region
        _
      $region16: #{apply_node_func.3} parent=11 // pred_fallthru
        _
    $region12: #{apply_node_func.3} parent=5 // pred_fallthru
      _
    %p99 = scmp.lt.s32.totalorder %s8, 2
    // Predicated region
    $region17: #{apply_node_func.3} parent=5 // pred_check
      %p100 = pneg %p99
    $region18: #{apply_node_func.3} parent=5 // pred_check_branch
      %102 = sbr.rel (%p100) target = $region20
    $region19: #{apply_node_func.3} parent=5 // pred_region
      // Predicated region
      $region21: #{apply_node_func.3} parent=19 // pred_check
        %p103 = pneg %p28
      $region22: #{apply_node_func.3} parent=19 // pred_check_branch
        %105 = sbr.rel (%p103) target = $region24
      $region23: #{apply_node_func.3} parent=19 // pred_region
        %s106 = smul.u32 32, %s8
        %p107 = scmp.lt.s32.totalorder %s106, 63
        %s108 = scalar_select %p107, %s106, 63
        %s109 = smul.addr %s108, 4
        %s110 = scalar_lea.vmem %s0, %s109
        %s111 = smul.u32 32, %s8
      $region24: #{apply_node_func.3} parent=19 // pred_fallthru
        _
    $region20: #{apply_node_func.3} parent=5 // pred_fallthru
      _
    %p112 = scmp.le.s32.totalorder 1, %s8
    %p113 = scmp.lt.s32.totalorder %s8, 3
    %p114 = pnand %p112, %p113
    %p115 = pneg %p114
    // Predicated region
    $region25: #{apply_node_func.3} parent=5 // pred_check
      _
    $region26: #{apply_node_func.3} parent=5 // pred_check_branch
      %117 = sbr.rel (%p114) target = $region28
    $region27: #{apply_node_func.3} parent=5 // pred_region
      %s118 = ssub.s32 %s8, 1
      %s119 = smul.u32 32, %s13
      %p120 = scmp.lt.s32.totalorder %s119, 63
      %s121 = scalar_select %p120, %s119, 63
      %s122 = smul.addr %s121, 4
      %s123 = scalar_lea.vmem %s0, %s122
      %p124 = pneg %p34
      %p125 = pneg %p31
      %p126 = pneg %p55
      %p127 = pneg %p52
      %p128 = pneg %p81
      %p129 = pneg %p78
      %p130 = scmp.lt.s32.totalorder %s13, 1
      %s131 = scalar_select %p130, %s13, 1
      %s132 = smul.addr %s131, 2
      %s133 = smul.addr %s132, 2
      %s134 = scalar_lea.vmem %s2, %s133
      %s135 = smul.u32 32, %s13
      %p136 = scmp.lt.s32.totalorder %s135, 63
      %s137 = scalar_select %p136, %s135, 63
      %s138 = smul.addr %s137, 4
      %s139 = scalar_lea.vmem %s0, %s138
      %s140 = smul.u32 32, %s13
      %p141 = scmp.lt.s32.totalorder %s13, 1
      %s142 = scalar_select %p141, %s13, 1
      %s143 = smul.addr %s142, 2
      %s144 = smul.addr %s143, 2
      %s145 = scalar_lea.vmem %s2, %s144
      %v147 = vld [vmem:[%s139] sm:$0xf]
      %v148 = vld [vmem:[%s139 + $0x4] sm:$0xf]
      %v149 = vld [vmem:[%s139 + $0x8] sm:$0xf]
      %v150 = vld [vmem:[%s139 + $0xc] sm:$0xf]
      %v151 = vld [vmem:[%s139 + $0x10] sm:$0xf]
      %v152 = vld [vmem:[%s139 + $0x14] sm:$0xf]
      %v153 = vld [vmem:[%s139 + $0x18] sm:$0xf]
      %v154 = vld [vmem:[%s139 + $0x1c] sm:$0xf]
      %v155 = vld [vmem:[%s139 + $0x20] sm:$0xf]
      %v156 = vld [vmem:[%s139 + $0x24] sm:$0xf]
      %v157 = vld [vmem:[%s139 + $0x28] sm:$0xf]
      %v158 = vld [vmem:[%s139 + $0x2c] sm:$0xf]
      %v159 = vld [vmem:[%s139 + $0x30] sm:$0xf]
      %v160 = vld [vmem:[%s139 + $0x34] sm:$0xf]
      %v161 = vld [vmem:[%s139 + $0x38] sm:$0xf]
      %v162 = vld [vmem:[%s139 + $0x3c] sm:$0xf]
      %v163 = vld [vmem:[%s139 + $0x40] sm:$0xf]
      %v164 = vld [vmem:[%s139 + $0x44] sm:$0xf]
      %v165 = vld [vmem:[%s139 + $0x48] sm:$0xf]
      %v166 = vld [vmem:[%s139 + $0x4c] sm:$0xf]
      %v167 = vld [vmem:[%s139 + $0x50] sm:$0xf]
      %v168 = vld [vmem:[%s139 + $0x54] sm:$0xf]
      %v169 = vld [vmem:[%s139 + $0x58] sm:$0xf]
      %v170 = vld [vmem:[%s139 + $0x5c] sm:$0xf]
      %v171 = vld [vmem:[%s139 + $0x60] sm:$0xf]
      %v172 = vld [vmem:[%s139 + $0x64] sm:$0xf]
      %v173 = vld [vmem:[%s139 + $0x68] sm:$0xf]
      %v174 = vld [vmem:[%s139 + $0x6c] sm:$0xf]
      %v175 = vld [vmem:[%s139 + $0x70] sm:$0xf]
      %v176 = vld [vmem:[%s139 + $0x74] sm:$0xf]
      %v177 = vld [vmem:[%s139 + $0x78] sm:$0xf]
      %v178 = vld [vmem:[%s139 + $0x7c] sm:$0xf]
      %v179 = vld [vmem:[%s1] sm:$0xff]
      %v180 = vld [vmem:[%s1 + $0x8] sm:$0xff]
      %v181 = vld [vmem:[%s1 + $0x10] sm:$0xff]
      %v182 = vld [vmem:[%s1 + $0x18] sm:$0xff]
      %v183 = vld [vmem:[%s1 + $0x20] sm:$0xff]
      %v184 = vld [vmem:[%s1 + $0x28] sm:$0xff]
      %v185 = vld [vmem:[%s1 + $0x30] sm:$0xff]
      %v186 = vld [vmem:[%s1 + $0x38] sm:$0xff]
      %v187 = vld [vmem:[%s1 + $0x40] sm:$0xff]
      %v188 = vld [vmem:[%s1 + $0x48] sm:$0xff]
      %v189 = vld [vmem:[%s1 + $0x50] sm:$0xff]
      %v190 = vld [vmem:[%s1 + $0x58] sm:$0xff]
      %v191 = vld [vmem:[%s1 + $0x60] sm:$0xff]
      %v192 = vld [vmem:[%s1 + $0x68] sm:$0xff]
      %v193 = vld [vmem:[%s1 + $0x70] sm:$0xff]
      %v194 = vld [vmem:[%s1 + $0x78] sm:$0xff]
      %v227 = vunpack.c.l.b16 %v147
      %v228 = vunpack.c.l.b16 %v148
      %v229 = vunpack.c.l.b16 %v149
      %v230 = vunpack.c.l.b16 %v150
      %v231 = vunpack.c.l.b16 %v151
      %v232 = vunpack.c.l.b16 %v152
      %v233 = vunpack.c.l.b16 %v153
      %v234 = vunpack.c.l.b16 %v154
      %v235 = vunpack.c.l.b16 %v155
      %v236 = vunpack.c.l.b16 %v156
      %v237 = vunpack.c.l.b16 %v157
      %v238 = vunpack.c.l.b16 %v158
      %v239 = vunpack.c.l.b16 %v159
      %v240 = vunpack.c.l.b16 %v160
      %v241 = vunpack.c.l.b16 %v161
      %v242 = vunpack.c.l.b16 %v162
      %v243 = vunpack.c.l.b16 %v163
      %v244 = vunpack.c.l.b16 %v164
      %v245 = vunpack.c.l.b16 %v165
      %v246 = vunpack.c.l.b16 %v166
      %v247 = vunpack.c.l.b16 %v167
      %v248 = vunpack.c.l.b16 %v168
      %v249 = vunpack.c.l.b16 %v169
      %v250 = vunpack.c.l.b16 %v170
      %v251 = vunpack.c.l.b16 %v171
      %v252 = vunpack.c.l.b16 %v172
      %v253 = vunpack.c.l.b16 %v173
      %v254 = vunpack.c.l.b16 %v174
      %v255 = vunpack.c.l.b16 %v175
      %v256 = vunpack.c.l.b16 %v176
      %v257 = vunpack.c.l.b16 %v177
      %v258 = vunpack.c.l.b16 %v178
      %v259 = vpack.c.b16 %v228, %v227
      %v260 = vpack.c.b16 %v230, %v229
      %v261 = vpack.c.b16 %v232, %v231
      %v262 = vpack.c.b16 %v234, %v233
      %v263 = vpack.c.b16 %v236, %v235
      %v264 = vpack.c.b16 %v238, %v237
      %v265 = vpack.c.b16 %v240, %v239
      %v266 = vpack.c.b16 %v242, %v241
      %v267 = vpack.c.b16 %v244, %v243
      %v268 = vpack.c.b16 %v246, %v245
      %v269 = vpack.c.b16 %v248, %v247
      %v270 = vpack.c.b16 %v250, %v249
      %v271 = vpack.c.b16 %v252, %v251
      %v272 = vpack.c.b16 %v254, %v253
      %v273 = vpack.c.b16 %v256, %v255
      %v274 = vpack.c.b16 %v258, %v257
      %v307 = vunpack.c.l.b16 %v179
      %v308 = vunpack.c.h.b16 %v179
      %v309 = vunpack.c.l.b16 %v180
      %v310 = vunpack.c.h.b16 %v180
      %v311 = vunpack.c.l.b16 %v181
      %v312 = vunpack.c.h.b16 %v181
      %v313 = vunpack.c.l.b16 %v182
      %v314 = vunpack.c.h.b16 %v182
      %v315 = vunpack.c.l.b16 %v183
      %v316 = vunpack.c.h.b16 %v183
      %v317 = vunpack.c.l.b16 %v184
      %v318 = vunpack.c.h.b16 %v184
      %v319 = vunpack.c.l.b16 %v185
      %v320 = vunpack.c.h.b16 %v185
      %v321 = vunpack.c.l.b16 %v186
      %v322 = vunpack.c.h.b16 %v186
      %v323 = vunpack.c.l.b16 %v187
      %v324 = vunpack.c.h.b16 %v187
      %v325 = vunpack.c.l.b16 %v188
      %v326 = vunpack.c.h.b16 %v188
      %v327 = vunpack.c.l.b16 %v189
      %v328 = vunpack.c.h.b16 %v189
      %v329 = vunpack.c.l.b16 %v190
      %v330 = vunpack.c.h.b16 %v190
      %v331 = vunpack.c.l.b16 %v191
      %v332 = vunpack.c.h.b16 %v191
      %v333 = vunpack.c.l.b16 %v192
      %v334 = vunpack.c.h.b16 %v192
      %v335 = vunpack.c.l.b16 %v193
      %v336 = vunpack.c.h.b16 %v193
      %v337 = vunpack.c.l.b16 %v194
      %v338 = vunpack.c.h.b16 %v194
      %v339 = vpack.c.b16 %v309, %v307
      %v340 = vpack.c.b16 %v310, %v308
      %v341 = vpack.c.b16 %v313, %v311
      %v342 = vpack.c.b16 %v314, %v312
      %v343 = vpack.c.b16 %v317, %v315
      %v344 = vpack.c.b16 %v318, %v316
      %v345 = vpack.c.b16 %v321, %v319
      %v346 = vpack.c.b16 %v322, %v320
      %v347 = vpack.c.b16 %v325, %v323
      %v348 = vpack.c.b16 %v326, %v324
      %v349 = vpack.c.b16 %v329, %v327
      %v350 = vpack.c.b16 %v330, %v328
      %v351 = vpack.c.b16 %v333, %v331
      %v352 = vpack.c.b16 %v334, %v332
      %v353 = vpack.c.b16 %v337, %v335
      %v354 = vpack.c.b16 %v338, %v336
      %371 = vmatprep.subr.bf16.mxu0 %v340
      %372 = vmatpush1.bf16.msra.mxu0 %v339
      %373 = vmatprep.subr.bf16.mxu0 %v342
      %374 = vmatpush1.bf16.msra.mxu0 %v341
      %375 = vmatprep.subr.bf16.mxu0 %v344
      %376 = vmatpush1.bf16.msra.mxu0 %v343
      %377 = vmatprep.subr.bf16.mxu0 %v346
      %378 = vmatpush1.bf16.msra.mxu0 %v345
      %379 = vmatprep.subr.bf16.mxu0 %v348
      %380 = vmatpush1.bf16.msra.mxu0 %v347
      %381 = vmatprep.subr.bf16.mxu0 %v350
      %382 = vmatpush1.bf16.msra.mxu0 %v349
      %383 = vmatprep.subr.bf16.mxu0 %v352
      %384 = vmatpush1.bf16.msra.mxu0 %v351
      %385 = vmatprep.subr.bf16.mxu0 %v354
      %386 = vmatpush1.bf16.msra.mxu0 %v353
      %387 = vmatprep.subr.bf16.mxu0 0
      %388 = vmatpush1.bf16.msra.mxu0 0
      %389 = vmatprep.subr.bf16.mxu0 0
      %390 = vmatpush1.bf16.msra.mxu0 0
      %391 = vmatprep.subr.bf16.mxu0 0
      %392 = vmatpush1.bf16.msra.mxu0 0
      %393 = vmatprep.subr.bf16.mxu0 0
      %394 = vmatpush1.bf16.msra.mxu0 0
      %395 = vmatprep.subr.bf16.mxu0 0
      %396 = vmatpush1.bf16.msra.mxu0 0
      %397 = vmatprep.subr.bf16.mxu0 0
      %398 = vmatpush1.bf16.msra.mxu0 0
      %399 = vmatprep.subr.bf16.mxu0 0
      %400 = vmatpush1.bf16.msra.mxu0 0
      %401 = vmatprep.subr.bf16.mxu0 0
      %402 = vmatpush1.bf16.msra.mxu0 0
      %403 = vmatprep.mubr.bf16.mxu0 0
      %404 = vmatmul.mubr.bf16.gmra.mrb[0].mxu0 %v259
      %v405 = vpop.f32.mrb[0].mxu0
      %v406 = vadd.f32 0.0, %v405
      %v407 = vpop.f32.mrb[0].mxu0
      %v408 = vadd.f32 0.0, %v407
      %v409 = vpop.f32.mrb[0].mxu0
      %v410 = vadd.f32 0.0, %v409
      %v411 = vpop.f32.mrb[0].mxu0
      %v412 = vadd.f32 0.0, %v411
      %413 = vmatprep.mubr.bf16.mxu0 0
      %414 = vmatmul.mubr.bf16.gmra.mrb[0].mxu0 %v260
      %v415 = vpop.f32.mrb[0].mxu0
      %v416 = vadd.f32 0.0, %v415
      %v417 = vpop.f32.mrb[0].mxu0
      %v418 = vadd.f32 0.0, %v417
      %v419 = vpop.f32.mrb[0].mxu0
      %v420 = vadd.f32 0.0, %v419
      %v421 = vpop.f32.mrb[0].mxu0
      %v422 = vadd.f32 0.0, %v421
      %423 = vmatprep.mubr.bf16.mxu0 0
      %424 = vmatmul.mubr.bf16.gmra.mrb[0].mxu0 %v261
      %v425 = vpop.f32.mrb[0].mxu0
      %v426 = vadd.f32 0.0, %v425
      %v427 = vpop.f32.mrb[0].mxu0
      %v428 = vadd.f32 0.0, %v427
      %v429 = vpop.f32.mrb[0].mxu0
      %v430 = vadd.f32 0.0, %v429
      %v431 = vpop.f32.mrb[0].mxu0
      %v432 = vadd.f32 0.0, %v431
      %433 = vmatprep.mubr.bf16.mxu0 0
      %434 = vmatmul.mubr.bf16.gmra.mrb[0].mxu0 %v262
      %v435 = vpop.f32.mrb[0].mxu0
      %v436 = vadd.f32 0.0, %v435
      %v437 = vpop.f32.mrb[0].mxu0
      %v438 = vadd.f32 0.0, %v437
      %v439 = vpop.f32.mrb[0].mxu0
      %v440 = vadd.f32 0.0, %v439
      %v441 = vpop.f32.mrb[0].mxu0
      %v442 = vadd.f32 0.0, %v441
      %443 = vmatprep.mubr.bf16.mxu0 0
      %444 = vmatmul.mubr.bf16.gmra.mrb[0].mxu0 %v263
      %v445 = vpop.f32.mrb[0].mxu0
      %v446 = vadd.f32 0.0, %v445
      %v447 = vpop.f32.mrb[0].mxu0
      %v448 = vadd.f32 0.0, %v447
      %v449 = vpop.f32.mrb[0].mxu0
      %v450 = vadd.f32 0.0, %v449
      %v451 = vpop.f32.mrb[0].mxu0
      %v452 = vadd.f32 0.0, %v451
      %453 = vmatprep.mubr.bf16.mxu0 0
      %454 = vmatmul.mubr.bf16.gmra.mrb[0].mxu0 %v264
      %v455 = vpop.f32.mrb[0].mxu0
      %v456 = vadd.f32 0.0, %v455
      %v457 = vpop.f32.mrb[0].mxu0
      %v458 = vadd.f32 0.0, %v457
      %v459 = vpop.f32.mrb[0].mxu0
      %v460 = vadd.f32 0.0, %v459
      %v461 = vpop.f32.mrb[0].mxu0
      %v462 = vadd.f32 0.0, %v461
      %463 = vmatprep.mubr.bf16.mxu0 0
      %464 = vmatmul.mubr.bf16.gmra.mrb[0].mxu0 %v265
      %v465 = vpop.f32.mrb[0].mxu0
      %v466 = vadd.f32 0.0, %v465
      %v467 = vpop.f32.mrb[0].mxu0
      %v468 = vadd.f32 0.0, %v467
      %v469 = vpop.f32.mrb[0].mxu0
      %v470 = vadd.f32 0.0, %v469
      %v471 = vpop.f32.mrb[0].mxu0
      %v472 = vadd.f32 0.0, %v471
      %473 = vmatprep.mubr.bf16.mxu0 0
      %474 = vmatmul.mubr.bf16.gmra.mrb[0].mxu0 %v266
      %v475 = vpop.f32.mrb[0].mxu0
      %v476 = vadd.f32 0.0, %v475
      %v477 = vpop.f32.mrb[0].mxu0
      %v478 = vadd.f32 0.0, %v477
      %v479 = vpop.f32.mrb[0].mxu0
      %v480 = vadd.f32 0.0, %v479
      %v481 = vpop.f32.mrb[0].mxu0
      %v482 = vadd.f32 0.0, %v481
      %483 = vmatprep.mubr.bf16.mxu0 0
      %484 = vmatmul.mubr.bf16.gmra.mrb[0].mxu0 %v267
      %v485 = vpop.f32.mrb[0].mxu0
      %v486 = vadd.f32 0.0, %v485
      %v487 = vpop.f32.mrb[0].mxu0
      %v488 = vadd.f32 0.0, %v487
      %v489 = vpop.f32.mrb[0].mxu0
      %v490 = vadd.f32 0.0, %v489
      %v491 = vpop.f32.mrb[0].mxu0
      %v492 = vadd.f32 0.0, %v491
      %493 = vmatprep.mubr.bf16.mxu0 0
      %494 = vmatmul.mubr.bf16.gmra.mrb[0].mxu0 %v268
      %v495 = vpop.f32.mrb[0].mxu0
      %v496 = vadd.f32 0.0, %v495
      %v497 = vpop.f32.mrb[0].mxu0
      %v498 = vadd.f32 0.0, %v497
      %v499 = vpop.f32.mrb[0].mxu0
      %v500 = vadd.f32 0.0, %v499
      %v501 = vpop.f32.mrb[0].mxu0
      %v502 = vadd.f32 0.0, %v501
      %503 = vmatprep.mubr.bf16.mxu0 0
      %504 = vmatmul.mubr.bf16.gmra.mrb[0].mxu0 %v269
      %v505 = vpop.f32.mrb[0].mxu0
      %v506 = vadd.f32 0.0, %v505
      %v507 = vpop.f32.mrb[0].mxu0
      %v508 = vadd.f32 0.0, %v507
      %v509 = vpop.f32.mrb[0].mxu0
      %v510 = vadd.f32 0.0, %v509
      %v511 = vpop.f32.mrb[0].mxu0
      %v512 = vadd.f32 0.0, %v511
      %513 = vmatprep.mubr.bf16.mxu0 0
      %514 = vmatmul.mubr.bf16.gmra.mrb[0].mxu0 %v270
      %v515 = vpop.f32.mrb[0].mxu0
      %v516 = vadd.f32 0.0, %v515
      %v517 = vpop.f32.mrb[0].mxu0
      %v518 = vadd.f32 0.0, %v517
      %v519 = vpop.f32.mrb[0].mxu0
      %v520 = vadd.f32 0.0, %v519
      %v521 = vpop.f32.mrb[0].mxu0
      %v522 = vadd.f32 0.0, %v521
      %523 = vmatprep.mubr.bf16.mxu0 0
      %524 = vmatmul.mubr.bf16.gmra.mrb[0].mxu0 %v271
      %v525 = vpop.f32.mrb[0].mxu0
      %v526 = vadd.f32 0.0, %v525
      %v527 = vpop.f32.mrb[0].mxu0
      %v528 = vadd.f32 0.0, %v527
      %v529 = vpop.f32.mrb[0].mxu0
      %v530 = vadd.f32 0.0, %v529
      %v531 = vpop.f32.mrb[0].mxu0
      %v532 = vadd.f32 0.0, %v531
      %533 = vmatprep.mubr.bf16.mxu0 0
      %534 = vmatmul.mubr.bf16.gmra.mrb[0].mxu0 %v272
      %v535 = vpop.f32.mrb[0].mxu0
      %v536 = vadd.f32 0.0, %v535
      %v537 = vpop.f32.mrb[0].mxu0
      %v538 = vadd.f32 0.0, %v537
      %v539 = vpop.f32.mrb[0].mxu0
      %v540 = vadd.f32 0.0, %v539
      %v541 = vpop.f32.mrb[0].mxu0
      %v542 = vadd.f32 0.0, %v541
      %543 = vmatprep.mubr.bf16.mxu0 0
      %544 = vmatmul.mubr.bf16.gmra.mrb[0].mxu0 %v273
      %v545 = vpop.f32.mrb[0].mxu0
      %v546 = vadd.f32 0.0, %v545
      %v547 = vpop.f32.mrb[0].mxu0
      %v548 = vadd.f32 0.0, %v547
      %v549 = vpop.f32.mrb[0].mxu0
      %v550 = vadd.f32 0.0, %v549
      %v551 = vpop.f32.mrb[0].mxu0
      %v552 = vadd.f32 0.0, %v551
      %553 = vmatprep.mubr.bf16.mxu0 0
      %554 = vmatmul.mubr.bf16.gmra.mrb[0].mxu0 %v274
      %v555 = vpop.f32.mrb[0].mxu0
      %v556 = vadd.f32 0.0, %v555
      %v557 = vpop.f32.mrb[0].mxu0
      %v558 = vadd.f32 0.0, %v557
      %v559 = vpop.f32.mrb[0].mxu0
      %v560 = vadd.f32 0.0, %v559
      %v561 = vpop.f32.mrb[0].mxu0
      %v562 = vadd.f32 0.0, %v561
      %563 = vdwg.mxu0
      %v564 = vadd.f32 %v406, %v410
      %v565 = vadd.f32 %v564, %v416
      %v566 = vadd.f32 %v565, %v420
      %v567 = vadd.f32 %v566, %v426
      %v568 = vadd.f32 %v567, %v430
      %v569 = vadd.f32 %v568, %v436
      %v570 = vadd.f32 %v569, %v440
      %v571 = vadd.f32 %v570, %v446
      %v572 = vadd.f32 %v571, %v450
      %v573 = vadd.f32 %v572, %v456
      %v574 = vadd.f32 %v573, %v460
      %v575 = vadd.f32 %v574, %v466
      %v576 = vadd.f32 %v575, %v470
      %v577 = vadd.f32 %v576, %v476
      %v578 = vadd.f32 %v577, %v480
      %v579 = vadd.f32 %v578, %v486
      %v580 = vadd.f32 %v579, %v490
      %v581 = vadd.f32 %v580, %v496
      %v582 = vadd.f32 %v581, %v500
      %v583 = vadd.f32 %v582, %v506
      %v584 = vadd.f32 %v583, %v510
      %v585 = vadd.f32 %v584, %v516
      %v586 = vadd.f32 %v585, %v520
      %v587 = vadd.f32 %v586, %v526
      %v588 = vadd.f32 %v587, %v530
      %v589 = vadd.f32 %v588, %v536
      %v590 = vadd.f32 %v589, %v540
      %v591 = vadd.f32 %v590, %v546
      %v592 = vadd.f32 %v591, %v550
      %v593 = vadd.f32 %v592, %v556
      %v594 = vadd.f32 %v593, %v560
      %v595 = vrot.slane %v594, 4
      %v596 = vadd.f32 %v594, %v595
      %v597 = vrot.slane %v596, 2
      %v598 = vadd.f32 %v596, %v597
      %v599 = vrot.slane %v598, 1
      %v600 = vadd.f32 %v598, %v599
      %v601 = vadd.f32 %v408, %v412
      %v602 = vadd.f32 %v601, %v418
      %v603 = vadd.f32 %v602, %v422
      %v604 = vadd.f32 %v603, %v428
      %v605 = vadd.f32 %v604, %v432
      %v606 = vadd.f32 %v605, %v438
      %v607 = vadd.f32 %v606, %v442
      %v608 = vadd.f32 %v607, %v448
      %v609 = vadd.f32 %v608, %v452
      %v610 = vadd.f32 %v609, %v458
      %v611 = vadd.f32 %v610, %v462
      %v612 = vadd.f32 %v611, %v468
      %v613 = vadd.f32 %v612, %v472
      %v614 = vadd.f32 %v613, %v478
      %v615 = vadd.f32 %v614, %v482
      %v616 = vadd.f32 %v615, %v488
      %v617 = vadd.f32 %v616, %v492
      %v618 = vadd.f32 %v617, %v498
      %v619 = vadd.f32 %v618, %v502
      %v620 = vadd.f32 %v619, %v508
      %v621 = vadd.f32 %v620, %v512
      %v622 = vadd.f32 %v621, %v518
      %v623 = vadd.f32 %v622, %v522
      %v624 = vadd.f32 %v623, %v528
      %v625 = vadd.f32 %v624, %v532
      %v626 = vadd.f32 %v625, %v538
      %v627 = vadd.f32 %v626, %v542
      %v628 = vadd.f32 %v627, %v548
      %v629 = vadd.f32 %v628, %v552
      %v630 = vadd.f32 %v629, %v558
      %v631 = vadd.f32 %v630, %v562
      %v632 = vrot.slane %v631, 4
      %v633 = vadd.f32 %v631, %v632
      %v634 = vrot.slane %v633, 2
      %v635 = vadd.f32 %v633, %v634
      %v636 = vrot.slane %v635, 1
      %v637 = vadd.f32 %v635, %v636
      %v638 = vmul.f32 %v406, %v406
      %v639 = vmul.f32 %v408, %v408
      %v640 = vmul.f32 %v410, %v410
      %v641 = vmul.f32 %v412, %v412
      %v642 = vmul.f32 %v416, %v416
      %v643 = vmul.f32 %v418, %v418
      %v644 = vmul.f32 %v420, %v420
      %v645 = vmul.f32 %v422, %v422
      %v646 = vmul.f32 %v426, %v426
      %v647 = vmul.f32 %v428, %v428
      %v648 = vmul.f32 %v430, %v430
      %v649 = vmul.f32 %v432, %v432
      %v650 = vmul.f32 %v436, %v436
      %v651 = vmul.f32 %v438, %v438
      %v652 = vmul.f32 %v440, %v440
      %v653 = vmul.f32 %v442, %v442
      %v654 = vmul.f32 %v446, %v446
      %v655 = vmul.f32 %v448, %v448
      %v656 = vmul.f32 %v450, %v450
      %v657 = vmul.f32 %v452, %v452
      %v658 = vmul.f32 %v456, %v456
      %v659 = vmul.f32 %v458, %v458
      %v660 = vmul.f32 %v460, %v460
      %v661 = vmul.f32 %v462, %v462
      %v662 = vmul.f32 %v466, %v466
      %v663 = vmul.f32 %v468, %v468
      %v664 = vmul.f32 %v470, %v470
      %v665 = vmul.f32 %v472, %v472
      %v666 = vmul.f32 %v476, %v476
      %v667 = vmul.f32 %v478, %v478
      %v668 = vmul.f32 %v480, %v480
      %v669 = vmul.f32 %v482, %v482
      %v670 = vmul.f32 %v486, %v486
      %v671 = vmul.f32 %v488, %v488
      %v672 = vmul.f32 %v490, %v490
      %v673 = vmul.f32 %v492, %v492
      %v674 = vmul.f32 %v496, %v496
      %v675 = vmul.f32 %v498, %v498
      %v676 = vmul.f32 %v500, %v500
      %v677 = vmul.f32 %v502, %v502
      %v678 = vmul.f32 %v506, %v506
      %v679 = vmul.f32 %v508, %v508
      %v680 = vmul.f32 %v510, %v510
      %v681 = vmul.f32 %v512, %v512
      %v682 = vmul.f32 %v516, %v516
      %v683 = vmul.f32 %v518, %v518
      %v684 = vmul.f32 %v520, %v520
      %v685 = vmul.f32 %v522, %v522
      %v686 = vmul.f32 %v526, %v526
      %v687 = vmul.f32 %v528, %v528
      %v688 = vmul.f32 %v530, %v530
      %v689 = vmul.f32 %v532, %v532
      %v690 = vmul.f32 %v536, %v536
      %v691 = vmul.f32 %v538, %v538
      %v692 = vmul.f32 %v540, %v540
      %v693 = vmul.f32 %v542, %v542
      %v694 = vmul.f32 %v546, %v546
      %v695 = vmul.f32 %v548, %v548
      %v696 = vmul.f32 %v550, %v550
      %v697 = vmul.f32 %v552, %v552
      %v698 = vmul.f32 %v556, %v556
      %v699 = vmul.f32 %v558, %v558
      %v700 = vmul.f32 %v560, %v560
      %v701 = vmul.f32 %v562, %v562
      %v702 = vadd.f32 %v638, %v640
      %v703 = vadd.f32 %v702, %v642
      %v704 = vadd.f32 %v703, %v644
      %v705 = vadd.f32 %v704, %v646
      %v706 = vadd.f32 %v705, %v648
      %v707 = vadd.f32 %v706, %v650
      %v708 = vadd.f32 %v707, %v652
      %v709 = vadd.f32 %v708, %v654
      %v710 = vadd.f32 %v709, %v656
      %v711 = vadd.f32 %v710, %v658
      %v712 = vadd.f32 %v711, %v660
      %v713 = vadd.f32 %v712, %v662
      %v714 = vadd.f32 %v713, %v664
      %v715 = vadd.f32 %v714, %v666
      %v716 = vadd.f32 %v715, %v668
      %v717 = vadd.f32 %v716, %v670
      %v718 = vadd.f32 %v717, %v672
      %v719 = vadd.f32 %v718, %v674
      %v720 = vadd.f32 %v719, %v676
      %v721 = vadd.f32 %v720, %v678
      %v722 = vadd.f32 %v721, %v680
      %v723 = vadd.f32 %v722, %v682
      %v724 = vadd.f32 %v723, %v684
      %v725 = vadd.f32 %v724, %v686
      %v726 = vadd.f32 %v725, %v688
      %v727 = vadd.f32 %v726, %v690
      %v728 = vadd.f32 %v727, %v692
      %v729 = vadd.f32 %v728, %v694
      %v730 = vadd.f32 %v729, %v696
      %v731 = vadd.f32 %v730, %v698
      %v732 = vadd.f32 %v731, %v700
      %v733 = vrot.slane %v732, 4
      %v734 = vadd.f32 %v732, %v733
      %v735 = vrot.slane %v734, 2
      %v736 = vadd.f32 %v734, %v735
      %v737 = vrot.slane %v736, 1
      %v738 = vadd.f32 %v736, %v737
      %v739 = vadd.f32 %v639, %v641
      %v740 = vadd.f32 %v739, %v643
      %v741 = vadd.f32 %v740, %v645
      %v742 = vadd.f32 %v741, %v647
      %v743 = vadd.f32 %v742, %v649
      %v744 = vadd.f32 %v743, %v651
      %v745 = vadd.f32 %v744, %v653
      %v746 = vadd.f32 %v745, %v655
      %v747 = vadd.f32 %v746, %v657
      %v748 = vadd.f32 %v747, %v659
      %v749 = vadd.f32 %v748, %v661
      %v750 = vadd.f32 %v749, %v663
      %v751 = vadd.f32 %v750, %v665
      %v752 = vadd.f32 %v751, %v667
      %v753 = vadd.f32 %v752, %v669
      %v754 = vadd.f32 %v753, %v671
      %v755 = vadd.f32 %v754, %v673
      %v756 = vadd.f32 %v755, %v675
      %v757 = vadd.f32 %v756, %v677
      %v758 = vadd.f32 %v757, %v679
      %v759 = vadd.f32 %v758, %v681
      %v760 = vadd.f32 %v759, %v683
      %v761 = vadd.f32 %v760, %v685
      %v762 = vadd.f32 %v761, %v687
      %v763 = vadd.f32 %v762, %v689
      %v764 = vadd.f32 %v763, %v691
      %v765 = vadd.f32 %v764, %v693
      %v766 = vadd.f32 %v765, %v695
      %v767 = vadd.f32 %v766, %v697
      %v768 = vadd.f32 %v767, %v699
      %v769 = vadd.f32 %v768, %v701
      %v770 = vrot.slane %v769, 4
      %v771 = vadd.f32 %v769, %v770
      %v772 = vrot.slane %v771, 2
      %v773 = vadd.f32 %v771, %v772
      %v774 = vrot.slane %v773, 1
      %v775 = vadd.f32 %v773, %v774
      %vm776 = vcmask 1040384
      %v777 = vsel %vm776, %v600, %v738
      %v778 = vsel %vm776, %v637, %v775
      %v781 = vcombine.low %v777, %v778
      %v783 = vunpack.c.l.s4 1983009808
      %v784 = vunpack.c.0.s8 %v783
      %v785 = vlaneseq
      %v786 = vshrl.u32 %v785, 7
      %v787 = vsub.s32 %v784, %v786
      %v788 = vrot.slane %v781, %v787
      %790 = vst [vmem:[%s145] sm:$0xf] %v788
      %p791 = scmp.lt.s32.totalorder %s13, 1
      %s792 = scalar_select %p791, %s13, 1
      %s793 = smul.addr %s792, 2
      %s794 = smul.addr %s793, 2
      %s795 = scalar_lea.vmem %s2, %s794
      // Predicated region
      $region29: #{apply_node_func.3} parent=27 // pred_check
        %p796 = pneg %p78
      $region30: #{apply_node_func.3} parent=27 // pred_check_branch
        %798 = sbr.rel (%p796) target = $region32
      $region31: #{apply_node_func.3} parent=27 // pred_region
        _
      $region32: #{apply_node_func.3} parent=27 // pred_fallthru
        _
    $region28: #{apply_node_func.3} parent=5 // pred_fallthru
      _
    %p799 = scmp.le.s32.totalorder 2, %s8
    // Predicated region
    $region33: #{apply_node_func.3} parent=5 // pred_check
      %p800 = pneg %p799
    $region34: #{apply_node_func.3} parent=5 // pred_check_branch
      %802 = sbr.rel (%p800) target = $region36
    $region35: #{apply_node_func.3} parent=5 // pred_region
      %s803 = ssub.s32 %s8, 2
      // Predicated region
      $region37: #{apply_node_func.3} parent=35 // pred_check
        %p804 = pneg %p84
      $region38: #{apply_node_func.3} parent=35 // pred_check_branch
        %806 = sbr.rel (%p804) target = $region40
      $region39: #{apply_node_func.3} parent=35 // pred_region
        %p807 = scmp.lt.s32.totalorder %s14, 1
        %s808 = scalar_select %p807, %s14, 1
        %s809 = smul.addr %s808, 2
        %s810 = smul.addr %s809, 2
        %s811 = scalar_lea.vmem %s2, %s810
      $region40: #{apply_node_func.3} parent=35 // pred_fallthru
        _
    $region36: #{apply_node_func.3} parent=5 // pred_fallthru
      _
  $region6: #{apply_node_func.3} parent=0 // loop_footer
    %s12 = sadd.s32 1, %s8
  $region7: #{apply_node_func.3} parent=0 // loop_footer_branch
    %7 = sbr.rel target = $region3
  $region8: #{apply_node_func.3} parent=0 // loop_exit
    _

// kernel: apply_node_func.5
$region0: #{apply_node_func.5}
  #allocation0 [shape = 'u32[]', space=smem, size = 0x4, offset = 0x4, fixed_abs, tag = 'smem constant byte address 0x4 - core index']
  #allocation1 [shape = 'u32[144,128]{1,0:T(1,128)}', space=vmem, size = 0x12000, scoped, tag = 'internal scratch']
  %s0 = inlined_call_operand.vmem [shape: bf16[512,128], index: 0, kind: input, shape index: {}]
  %s1 = inlined_call_operand.vmem [shape: f32[1,128], index: 1, kind: input, shape index: {}]
  %s2 = inlined_call_operand.vmem [shape: f32[1,128], index: 2, kind: input, shape index: {}]
  %s3 = inlined_call_operand.vmem [shape: f32[512,128], index: 3, kind: output, shape index: {}]
  %s4 = sld [smem:[#allocation0]]
  $region45: #{apply_node_func.5} parent=0
    _
  %s6 = ssub.s32 1, %s4
  %s7 = scalar_select 0, %s6, %s4
  loop: start=0, step=1, limit=4
  $region2: #{apply_node_func.5} parent=0 // loop_pre_header
    _
  $region3: #{apply_node_func.5} parent=0 // loop_header
    %s9 = sphi 0, %s13
    %p10 = scmp.ge.s32.totalorder %s9, 4
    %s19 = sphi 0, %s21
    %s22 = sphi 0, %s19
    %s23 = sphi 0, %s22
    %s39 = sphi 0, %s23
    %s43 = sphi 0, %s43
    %s45 = sphi 0, %s43
    %s46 = sphi 0, %s45
    %s60 = sphi 0, %s46
    %s64 = sphi 0, %s64
    %s66 = sphi 0, %s64
    %s67 = sphi 0, %s66
    %s81 = sphi 0, %s67
    %s87 = sphi 0, %s89
    %s90 = sphi 0, %s87
    %s91 = sphi 0, %s90
    %s107 = sphi 0, %s91
  $region4: #{apply_node_func.5} parent=0 // loop_header_branch
    %12 = sbr.rel (%p10) target = $region8
  $region5: #{apply_node_func.5} parent=0 // loop_body
    %s14 = ssub.s32 %s9, 1
    %s15 = ssub.s32 %s9, 2
    %s16 = sadd.s32 %s9, 1
    %s17 = ssub.s32 %s9, %s16
    %p18 = scmp.eq.s32.totalorder %s17, 0
    %s20 = sadd.s32 %s19, 1
    %s21 = scalar_select %p18, %s19, %s20
    %p24 = pneg %p18
    %p25 = scmp.eq.s32.totalorder %s9, 1
    %p26 = por %p24, %p25
    %p27 = scmp.ne.s32.totalorder %s19, %s22
    %p28 = scmp.eq.s32.totalorder %s9, 0
    %p29 = por %p27, %p28
    %p30 = scmp.ne.s32.totalorder %s19, %s22
    %p31 = scmp.eq.s32.totalorder %s14, 1
    %p32 = por %p30, %p31
    %p33 = scmp.ne.s32.totalorder %s22, %s23
    %p34 = scmp.eq.s32.totalorder %s14, 0
    %p35 = por %p33, %p34
    %p36 = scmp.ne.s32.totalorder %s22, %s23
    %p37 = scmp.eq.s32.totalorder %s15, 1
    %p38 = por %p36, %p37
    %p40 = scmp.ne.s32.totalorder %s23, %s39
    %p41 = scmp.eq.s32.totalorder %s15, 0
    %p42 = por %p40, %p41
    %s44 = sadd.s32 %s43, 1
    %p47 = scmp.eq.s32.totalorder %s9, 1
    %p48 = scmp.ne.s32.totalorder %s43, %s45
    %p49 = scmp.eq.s32.totalorder %s9, 0
    %p50 = por %p48, %p49
    %p51 = scmp.ne.s32.totalorder %s43, %s45
    %p52 = scmp.eq.s32.totalorder %s14, 1
    %p53 = por %p51, %p52
    %p54 = scmp.ne.s32.totalorder %s45, %s46
    %p55 = scmp.eq.s32.totalorder %s14, 0
    %p56 = por %p54, %p55
    %p57 = scmp.ne.s32.totalorder %s45, %s46
    %p58 = scmp.eq.s32.totalorder %s15, 1
    %p59 = por %p57, %p58
    %p61 = scmp.ne.s32.totalorder %s46, %s60
    %p62 = scmp.eq.s32.totalorder %s15, 0
    %p63 = por %p61, %p62
    %s65 = sadd.s32 %s64, 1
    %p68 = scmp.eq.s32.totalorder %s9, 1
    %p69 = scmp.ne.s32.totalorder %s64, %s66
    %p70 = scmp.eq.s32.totalorder %s9, 0
    %p71 = por %p69, %p70
    %p72 = scmp.ne.s32.totalorder %s64, %s66
    %p73 = scmp.eq.s32.totalorder %s14, 1
    %p74 = por %p72, %p73
    %p75 = scmp.ne.s32.totalorder %s66, %s67
    %p76 = scmp.eq.s32.totalorder %s14, 0
    %p77 = por %p75, %p76
    %p78 = scmp.ne.s32.totalorder %s66, %s67
    %p79 = scmp.eq.s32.totalorder %s15, 1
    %p80 = por %p78, %p79
    %p82 = scmp.ne.s32.totalorder %s67, %s81
    %p83 = scmp.eq.s32.totalorder %s15, 0
    %p84 = por %p82, %p83
    %s85 = ssub.s32 %s9, %s16
    %p86 = scmp.eq.s32.totalorder %s85, 0
    %s88 = sadd.s32 %s87, 1
    %s89 = scalar_select %p86, %s87, %s88
    %p92 = pneg %p86
    %p93 = scmp.eq.s32.totalorder %s9, 1
    %p94 = por %p92, %p93
    %p95 = scmp.ne.s32.totalorder %s87, %s90
    %p96 = scmp.eq.s32.totalorder %s9, 0
    %p97 = por %p95, %p96
    %p98 = scmp.ne.s32.totalorder %s87, %s90
    %p99 = scmp.eq.s32.totalorder %s14, 1
    %p100 = por %p98, %p99
    %p101 = scmp.ne.s32.totalorder %s90, %s91
    %p102 = scmp.eq.s32.totalorder %s14, 0
    %p103 = por %p101, %p102
    %p104 = scmp.ne.s32.totalorder %s90, %s91
    %p105 = scmp.eq.s32.totalorder %s15, 1
    %p106 = por %p104, %p105
    %p108 = scmp.ne.s32.totalorder %s91, %s107
    %p109 = scmp.eq.s32.totalorder %s15, 0
    %p110 = por %p108, %p109
    %p111 = scmp.le.s32.totalorder 1, %s9
    %p112 = scmp.lt.s32.totalorder %s9, 3
    %p113 = pnand %p111, %p112
    %p114 = pneg %p113
    // Predicated region
    $region9: #{apply_node_func.5} parent=5 // pred_check
      _
    $region10: #{apply_node_func.5} parent=5 // pred_check_branch
      %116 = sbr.rel (%p113) target = $region12
    $region11: #{apply_node_func.5} parent=5 // pred_region
      %s117 = ssub.s32 %s9, 1
      // Predicated region
      $region13: #{apply_node_func.5} parent=11 // pred_check
        %p118 = pneg %p56
      $region14: #{apply_node_func.5} parent=11 // pred_check_branch
        %120 = sbr.rel (%p118) target = $region16
      $region15: #{apply_node_func.5} parent=11 // pred_region
        _
      $region16: #{apply_node_func.5} parent=11 // pred_fallthru
        _
      // Predicated region
      $region17: #{apply_node_func.5} parent=11 // pred_check
        %p121 = pneg %p77
      $region18: #{apply_node_func.5} parent=11 // pred_check_branch
        %123 = sbr.rel (%p121) target = $region20
      $region19: #{apply_node_func.5} parent=11 // pred_region
        _
      $region20: #{apply_node_func.5} parent=11 // pred_fallthru
        _
    $region12: #{apply_node_func.5} parent=5 // pred_fallthru
      _
    %p124 = scmp.lt.s32.totalorder %s9, 2
    // Predicated region
    $region21: #{apply_node_func.5} parent=5 // pred_check
      %p125 = pneg %p124
    $region22: #{apply_node_func.5} parent=5 // pred_check_branch
      %127 = sbr.rel (%p125) target = $region24
    $region23: #{apply_node_func.5} parent=5 // pred_region
      // Predicated region
      $region25: #{apply_node_func.5} parent=23 // pred_check
        %p128 = pneg %p29
      $region26: #{apply_node_func.5} parent=23 // pred_check_branch
        %130 = sbr.rel (%p128) target = $region28
      $region27: #{apply_node_func.5} parent=23 // pred_region
        %s131 = smul.u32 32, %s9
        %p132 = scmp.lt.s32.totalorder %s131, 63
        %s133 = scalar_select %p132, %s131, 63
        %s134 = smul.addr %s133, 4
        %s135 = scalar_lea.vmem %s0, %s134
        %s136 = smul.u32 32, %s9
      $region28: #{apply_node_func.5} parent=23 // pred_fallthru
        _
    $region24: #{apply_node_func.5} parent=5 // pred_fallthru
      _
    %p137 = scmp.le.s32.totalorder 1, %s9
    %p138 = scmp.lt.s32.totalorder %s9, 3
    %p139 = pnand %p137, %p138
    %p140 = pneg %p139
    // Predicated region
    $region29: #{apply_node_func.5} parent=5 // pred_check
      _
    $region30: #{apply_node_func.5} parent=5 // pred_check_branch
      %142 = sbr.rel (%p139) target = $region32
    $region31: #{apply_node_func.5} parent=5 // pred_region
      %s143 = ssub.s32 %s9, 1
      %s144 = smul.u32 32, %s14
      %p145 = scmp.lt.s32.totalorder %s144, 63
      %s146 = scalar_select %p145, %s144, 63
      %s147 = smul.addr %s146, 4
      %s148 = scalar_lea.vmem %s0, %s147
      %p149 = pneg %p35
      %p150 = pneg %p32
      %p151 = pneg %p56
      %p152 = pneg %p53
      %p153 = pneg %p77
      %p154 = pneg %p74
      %p155 = pneg %p103
      %p156 = pneg %p100
      %s157 = smul.u32 32, %s14
      %p158 = scmp.lt.s32.totalorder %s157, 63
      %s159 = scalar_select %p158, %s157, 63
      %s160 = smul.addr %s159, 8
      %s161 = scalar_lea.vmem %s3, %s160
      %s162 = smul.u32 32, %s14
      %p163 = scmp.lt.s32.totalorder %s162, 63
      %s164 = scalar_select %p163, %s162, 63
      %s165 = smul.addr %s164, 4
      %s166 = scalar_lea.vmem %s0, %s165
      %s167 = smul.u32 32, %s14
      %s168 = smul.u32 32, %s14
      %p169 = scmp.lt.s32.totalorder %s168, 63
      %s170 = scalar_select %p169, %s168, 63
      %s171 = smul.addr %s170, 8
      %s172 = scalar_lea.vmem %s3, %s171
      %s173 = smul.u32 32, %s14
      %v174 = vld [vmem:[%s166] sm:$0xf]
      %v175 = vld [vmem:[%s166 + $0x4] sm:$0xf]
      %v176 = vld [vmem:[%s166 + $0x8] sm:$0xf]
      %v177 = vld [vmem:[%s166 + $0xc] sm:$0xf]
      %v178 = vld [vmem:[%s166 + $0x10] sm:$0xf]
      %v179 = vld [vmem:[%s166 + $0x14] sm:$0xf]
      %v180 = vld [vmem:[%s166 + $0x18] sm:$0xf]
      %v181 = vld [vmem:[%s166 + $0x1c] sm:$0xf]
      %v182 = vld [vmem:[%s166 + $0x20] sm:$0xf]
      %v183 = vld [vmem:[%s166 + $0x24] sm:$0xf]
      %v184 = vld [vmem:[%s166 + $0x28] sm:$0xf]
      %v185 = vld [vmem:[%s166 + $0x2c] sm:$0xf]
      %v186 = vld [vmem:[%s166 + $0x30] sm:$0xf]
      %v187 = vld [vmem:[%s166 + $0x34] sm:$0xf]
      %v188 = vld [vmem:[%s166 + $0x38] sm:$0xf]
      %v189 = vld [vmem:[%s166 + $0x3c] sm:$0xf]
      %v190 = vld [vmem:[%s166 + $0x40] sm:$0xf]
      %v191 = vld [vmem:[%s166 + $0x44] sm:$0xf]
      %v192 = vld [vmem:[%s166 + $0x48] sm:$0xf]
      %v193 = vld [vmem:[%s166 + $0x4c] sm:$0xf]
      %v194 = vld [vmem:[%s166 + $0x50] sm:$0xf]
      %v195 = vld [vmem:[%s166 + $0x54] sm:$0xf]
      %v196 = vld [vmem:[%s166 + $0x58] sm:$0xf]
      %v197 = vld [vmem:[%s166 + $0x5c] sm:$0xf]
      %v198 = vld [vmem:[%s166 + $0x60] sm:$0xf]
      %v199 = vld [vmem:[%s166 + $0x64] sm:$0xf]
      %v200 = vld [vmem:[%s166 + $0x68] sm:$0xf]
      %v201 = vld [vmem:[%s166 + $0x6c] sm:$0xf]
      %v202 = vld [vmem:[%s166 + $0x70] sm:$0xf]
      %v203 = vld [vmem:[%s166 + $0x74] sm:$0xf]
      %v204 = vld [vmem:[%s166 + $0x78] sm:$0xf]
      %v205 = vld [vmem:[%s166 + $0x7c] sm:$0xf]
      %v206 = vunpack.c.l.bf16 %v174
      %v207 = vunpack.c.l.bf16 %v175
      %v208 = vunpack.c.l.bf16 %v176
      %v209 = vunpack.c.l.bf16 %v177
      %v210 = vunpack.c.l.bf16 %v178
      %v211 = vunpack.c.l.bf16 %v179
      %v212 = vunpack.c.l.bf16 %v180
      %v213 = vunpack.c.l.bf16 %v181
      %v214 = vunpack.c.l.bf16 %v182
      %v215 = vunpack.c.l.bf16 %v183
      %v216 = vunpack.c.l.bf16 %v184
      %v217 = vunpack.c.l.bf16 %v185
      %v218 = vunpack.c.l.bf16 %v186
      %v219 = vunpack.c.l.bf16 %v187
      %v220 = vunpack.c.l.bf16 %v188
      %v221 = vunpack.c.l.bf16 %v189
      %v222 = vunpack.c.l.bf16 %v190
      %v223 = vunpack.c.l.bf16 %v191
      %v224 = vunpack.c.l.bf16 %v192
      %v225 = vunpack.c.l.bf16 %v193
      %v226 = vunpack.c.l.bf16 %v194
      %v227 = vunpack.c.l.bf16 %v195
      %v228 = vunpack.c.l.bf16 %v196
      %v229 = vunpack.c.l.bf16 %v197
      %v230 = vunpack.c.l.bf16 %v198
      %v231 = vunpack.c.l.bf16 %v199
      %v232 = vunpack.c.l.bf16 %v200
      %v233 = vunpack.c.l.bf16 %v201
      %v234 = vunpack.c.l.bf16 %v202
      %v235 = vunpack.c.l.bf16 %v203
      %v236 = vunpack.c.l.bf16 %v204
      %v237 = vunpack.c.l.bf16 %v205
      %v238 = vld [vmem:[%s1] sm:$0x1]
      %v240 = vlaneseq
      %v241 = vshrl.u32 %v240, 7
      %v242 = vsub.s32 0, %v241
      %v243 = vrot.slane %v238, %v242
      %v245 = vmul.f32 %v206, %v243
      %v246 = vmul.f32 %v207, %v243
      %v247 = vmul.f32 %v208, %v243
      %v248 = vmul.f32 %v209, %v243
      %v249 = vmul.f32 %v210, %v243
      %v250 = vmul.f32 %v211, %v243
      %v251 = vmul.f32 %v212, %v243
      %v252 = vmul.f32 %v213, %v243
      %v253 = vmul.f32 %v214, %v243
      %v254 = vmul.f32 %v215, %v243
      %v255 = vmul.f32 %v216, %v243
      %v256 = vmul.f32 %v217, %v243
      %v257 = vmul.f32 %v218, %v243
      %v258 = vmul.f32 %v219, %v243
      %v259 = vmul.f32 %v220, %v243
      %v260 = vmul.f32 %v221, %v243
      %v261 = vmul.f32 %v222, %v243
      %v262 = vmul.f32 %v223, %v243
      %v263 = vmul.f32 %v224, %v243
      %v264 = vmul.f32 %v225, %v243
      %v265 = vmul.f32 %v226, %v243
      %v266 = vmul.f32 %v227, %v243
      %v267 = vmul.f32 %v228, %v243
      %v268 = vmul.f32 %v229, %v243
      %v269 = vmul.f32 %v230, %v243
      %v270 = vmul.f32 %v231, %v243
      %v271 = vmul.f32 %v232, %v243
      %v272 = vmul.f32 %v233, %v243
      %v273 = vmul.f32 %v234, %v243
      %v274 = vmul.f32 %v235, %v243
      %v275 = vmul.f32 %v236, %v243
      %v276 = vmul.f32 %v237, %v243
      %v277 = vld [vmem:[%s2] sm:$0x1]
      %v279 = vlaneseq
      %v280 = vshrl.u32 %v279, 7
      %v281 = vsub.s32 0, %v280
      %v282 = vrot.slane %v277, %v281
      %v284 = vadd.f32 %v245, %v282
      %v285 = vadd.f32 %v246, %v282
      %v286 = vadd.f32 %v247, %v282
      %v287 = vadd.f32 %v248, %v282
      %v288 = vadd.f32 %v249, %v282
      %v289 = vadd.f32 %v250, %v282
      %v290 = vadd.f32 %v251, %v282
      %v291 = vadd.f32 %v252, %v282
      %v292 = vadd.f32 %v253, %v282
      %v293 = vadd.f32 %v254, %v282
      %v294 = vadd.f32 %v255, %v282
      %v295 = vadd.f32 %v256, %v282
      %v296 = vadd.f32 %v257, %v282
      %v297 = vadd.f32 %v258, %v282
      %v298 = vadd.f32 %v259, %v282
      %v299 = vadd.f32 %v260, %v282
      %v300 = vadd.f32 %v261, %v282
      %v301 = vadd.f32 %v262, %v282
      %v302 = vadd.f32 %v263, %v282
      %v303 = vadd.f32 %v264, %v282
      %v304 = vadd.f32 %v265, %v282
      %v305 = vadd.f32 %v266, %v282
      %v306 = vadd.f32 %v267, %v282
      %v307 = vadd.f32 %v268, %v282
      %v308 = vadd.f32 %v269, %v282
      %v309 = vadd.f32 %v270, %v282
      %v310 = vadd.f32 %v271, %v282
      %v311 = vadd.f32 %v272, %v282
      %v312 = vadd.f32 %v273, %v282
      %v313 = vadd.f32 %v274, %v282
      %v314 = vadd.f32 %v275, %v282
      %v315 = vadd.f32 %v276, %v282
      %v316 = vmax.f32 %v284, 0.0
      %v317 = vmax.f32 %v285, 0.0
      %v318 = vmax.f32 %v286, 0.0
      %v319 = vmax.f32 %v287, 0.0
      %v320 = vmax.f32 %v288, 0.0
      %v321 = vmax.f32 %v289, 0.0
      %v322 = vmax.f32 %v290, 0.0
      %v323 = vmax.f32 %v291, 0.0
      %v324 = vmax.f32 %v292, 0.0
      %v325 = vmax.f32 %v293, 0.0
      %v326 = vmax.f32 %v294, 0.0
      %v327 = vmax.f32 %v295, 0.0
      %v328 = vmax.f32 %v296, 0.0
      %v329 = vmax.f32 %v297, 0.0
      %v330 = vmax.f32 %v298, 0.0
      %v331 = vmax.f32 %v299, 0.0
      %v332 = vmax.f32 %v300, 0.0
      %v333 = vmax.f32 %v301, 0.0
      %v334 = vmax.f32 %v302, 0.0
      %v335 = vmax.f32 %v303, 0.0
      %v336 = vmax.f32 %v304, 0.0
      %v337 = vmax.f32 %v305, 0.0
      %v338 = vmax.f32 %v306, 0.0
      %v339 = vmax.f32 %v307, 0.0
      %v340 = vmax.f32 %v308, 0.0
      %v341 = vmax.f32 %v309, 0.0
      %v342 = vmax.f32 %v310, 0.0
      %v343 = vmax.f32 %v311, 0.0
      %v344 = vmax.f32 %v312, 0.0
      %v345 = vmax.f32 %v313, 0.0
      %v346 = vmax.f32 %v314, 0.0
      %v347 = vmax.f32 %v315, 0.0
      %348 = vst [vmem:[%s172] sm:$0xff] %v316
      %349 = vst [vmem:[%s172 + $0x8] sm:$0xff] %v317
      %350 = vst [vmem:[%s172 + $0x10] sm:$0xff] %v318
      %351 = vst [vmem:[%s172 + $0x18] sm:$0xff] %v319
      %352 = vst [vmem:[%s172 + $0x20] sm:$0xff] %v320
      %353 = vst [vmem:[%s172 + $0x28] sm:$0xff] %v321
      %354 = vst [vmem:[%s172 + $0x30] sm:$0xff] %v322
      %355 = vst [vmem:[%s172 + $0x38] sm:$0xff] %v323
      %356 = vst [vmem:[%s172 + $0x40] sm:$0xff] %v324
      %357 = vst [vmem:[%s172 + $0x48] sm:$0xff] %v325
      %358 = vst [vmem:[%s172 + $0x50] sm:$0xff] %v326
      %359 = vst [vmem:[%s172 + $0x58] sm:$0xff] %v327
      %360 = vst [vmem:[%s172 + $0x60] sm:$0xff] %v328
      %361 = vst [vmem:[%s172 + $0x68] sm:$0xff] %v329
      %362 = vst [vmem:[%s172 + $0x70] sm:$0xff] %v330
      %363 = vst [vmem:[%s172 + $0x78] sm:$0xff] %v331
      %364 = vst [vmem:[%s172 + $0x80] sm:$0xff] %v332
      %365 = vst [vmem:[%s172 + $0x88] sm:$0xff] %v333
      %366 = vst [vmem:[%s172 + $0x90] sm:$0xff] %v334
      %367 = vst [vmem:[%s172 + $0x98] sm:$0xff] %v335
      %368 = vst [vmem:[%s172 + $0xa0] sm:$0xff] %v336
      %369 = vst [vmem:[%s172 + $0xa8] sm:$0xff] %v337
      %370 = vst [vmem:[%s172 + $0xb0] sm:$0xff] %v338
      %371 = vst [vmem:[%s172 + $0xb8] sm:$0xff] %v339
      %372 = vst [vmem:[%s172 + $0xc0] sm:$0xff] %v340
      %373 = vst [vmem:[%s172 + $0xc8] sm:$0xff] %v341
      %374 = vst [vmem:[%s172 + $0xd0] sm:$0xff] %v342
      %375 = vst [vmem:[%s172 + $0xd8] sm:$0xff] %v343
      %376 = vst [vmem:[%s172 + $0xe0] sm:$0xff] %v344
      %377 = vst [vmem:[%s172 + $0xe8] sm:$0xff] %v345
      %378 = vst [vmem:[%s172 + $0xf0] sm:$0xff] %v346
      %379 = vst [vmem:[%s172 + $0xf8] sm:$0xff] %v347
      %s380 = smul.u32 32, %s14
      %p381 = scmp.lt.s32.totalorder %s380, 63
      %s382 = scalar_select %p381, %s380, 63
      %s383 = smul.addr %s382, 8
      %s384 = scalar_lea.vmem %s3, %s383
      // Predicated region
      $region33: #{apply_node_func.5} parent=31 // pred_check
        %p385 = pneg %p100
      $region34: #{apply_node_func.5} parent=31 // pred_check_branch
        %387 = sbr.rel (%p385) target = $region36
      $region35: #{apply_node_func.5} parent=31 // pred_region
        %s388 = smul.u32 32, %s14
      $region36: #{apply_node_func.5} parent=31 // pred_fallthru
        _
    $region32: #{apply_node_func.5} parent=5 // pred_fallthru
      _
    %p389 = scmp.le.s32.totalorder 2, %s9
    // Predicated region
    $region37: #{apply_node_func.5} parent=5 // pred_check
      %p390 = pneg %p389
    $region38: #{apply_node_func.5} parent=5 // pred_check_branch
      %392 = sbr.rel (%p390) target = $region40
    $region39: #{apply_node_func.5} parent=5 // pred_region
      %s393 = ssub.s32 %s9, 2
      // Predicated region
      $region41: #{apply_node_func.5} parent=39 // pred_check
        %p394 = pneg %p106
      $region42: #{apply_node_func.5} parent=39 // pred_check_branch
        %396 = sbr.rel (%p394) target = $region44
      $region43: #{apply_node_func.5} parent=39 // pred_region
        %s397 = smul.u32 32, %s15
        %p398 = scmp.lt.s32.totalorder %s397, 63
        %s399 = scalar_select %p398, %s397, 63
        %s400 = smul.addr %s399, 8
        %s401 = scalar_lea.vmem %s3, %s400
      $region44: #{apply_node_func.5} parent=39 // pred_fallthru
        _
    $region40: #{apply_node_func.5} parent=5 // pred_fallthru
      _
  $region6: #{apply_node_func.5} parent=0 // loop_footer
    %s13 = sadd.s32 1, %s9
  $region7: #{apply_node_func.5} parent=0 // loop_footer_branch
    %8 = sbr.rel target = $region3
  $region8: #{apply_node_func.5} parent=0 // loop_exit
    _

// kernel: apply_node_func.4
$region0: #{apply_node_func.4}
  #allocation0 [shape = 'u32[]', space=smem, size = 0x4, offset = 0x4, fixed_abs, tag = 'smem constant byte address 0x4 - core index']
  #allocation1 [shape = 'u32[144,128]{1,0:T(1,128)}', space=vmem, size = 0x12000, scoped, tag = 'internal scratch']
  %s0 = inlined_call_operand.vmem [shape: bf16[512,128], index: 0, kind: input, shape index: {}]
  %s1 = inlined_call_operand.vmem [shape: bf16[128,256], index: 1, kind: input, shape index: {}]
  %s2 = inlined_call_operand.vmem [shape: f32[1,256], index: 2, kind: input, shape index: {}]
  %s3 = inlined_call_operand.vmem [shape: f32[1,256], index: 3, kind: input, shape index: {}]
  %s4 = inlined_call_operand.vmem [shape: bf16[256,128], index: 4, kind: input, shape index: {}]
  %s5 = inlined_call_operand.vmem [shape: bf16[512,128], index: 5, kind: output, shape index: {0}]
  %s6 = inlined_call_operand.vmem [shape: f32[2,2,128], index: 6, kind: output, shape index: {1}]
  %7 = xla_tuple %s5, %s6
  %s8 = sld [smem:[#allocation0]]
  $region61: #{apply_node_func.4} parent=0
    _
  %s10 = ssub.s32 1, %s8
  %s11 = scalar_select 0, %s10, %s8
  loop: start=0, step=1, limit=4
  $region2: #{apply_node_func.4} parent=0 // loop_pre_header
    _
  $region3: #{apply_node_func.4} parent=0 // loop_header
    %s13 = sphi 0, %s17
    %p14 = scmp.ge.s32.totalorder %s13, 4
    %s23 = sphi 0, %s25
    %s26 = sphi 0, %s23
    %s27 = sphi 0, %s26
    %s43 = sphi 0, %s27
    %s47 = sphi 0, %s47
    %s49 = sphi 0, %s47
    %s50 = sphi 0, %s49
    %s64 = sphi 0, %s50
    %s68 = sphi 0, %s68
    %s70 = sphi 0, %s68
    %s71 = sphi 0, %s70
    %s85 = sphi 0, %s71
    %s89 = sphi 0, %s89
    %s91 = sphi 0, %s89
    %s92 = sphi 0, %s91
    %s106 = sphi 0, %s92
    %s110 = sphi 0, %s110
    %s112 = sphi 0, %s110
    %s113 = sphi 0, %s112
    %s127 = sphi 0, %s113
    %s133 = sphi 0, %s135
    %s136 = sphi 0, %s133
    %s137 = sphi 0, %s136
    %s153 = sphi 0, %s137
    %s159 = sphi 0, %s161
    %s162 = sphi 0, %s159
    %s163 = sphi 0, %s162
    %s179 = sphi 0, %s163
  $region4: #{apply_node_func.4} parent=0 // loop_header_branch
    %16 = sbr.rel (%p14) target = $region8
  $region5: #{apply_node_func.4} parent=0 // loop_body
    %s18 = ssub.s32 %s13, 1
    %s19 = ssub.s32 %s13, 2
    %s20 = sadd.s32 %s13, 1
    %s21 = ssub.s32 %s13, %s20
    %p22 = scmp.eq.s32.totalorder %s21, 0
    %s24 = sadd.s32 %s23, 1
    %s25 = scalar_select %p22, %s23, %s24
    %p28 = pneg %p22
    %p29 = scmp.eq.s32.totalorder %s13, 1
    %p30 = por %p28, %p29
    %p31 = scmp.ne.s32.totalorder %s23, %s26
    %p32 = scmp.eq.s32.totalorder %s13, 0
    %p33 = por %p31, %p32
    %p34 = scmp.ne.s32.totalorder %s23, %s26
    %p35 = scmp.eq.s32.totalorder %s18, 1
    %p36 = por %p34, %p35
    %p37 = scmp.ne.s32.totalorder %s26, %s27
    %p38 = scmp.eq.s32.totalorder %s18, 0
    %p39 = por %p37, %p38
    %p40 = scmp.ne.s32.totalorder %s26, %s27
    %p41 = scmp.eq.s32.totalorder %s19, 1
    %p42 = por %p40, %p41
    %p44 = scmp.ne.s32.totalorder %s27, %s43
    %p45 = scmp.eq.s32.totalorder %s19, 0
    %p46 = por %p44, %p45
    %s48 = sadd.s32 %s47, 1
    %p51 = scmp.eq.s32.totalorder %s13, 1
    %p52 = scmp.ne.s32.totalorder %s47, %s49
    %p53 = scmp.eq.s32.totalorder %s13, 0
    %p54 = por %p52, %p53
    %p55 = scmp.ne.s32.totalorder %s47, %s49
    %p56 = scmp.eq.s32.totalorder %s18, 1
    %p57 = por %p55, %p56
    %p58 = scmp.ne.s32.totalorder %s49, %s50
    %p59 = scmp.eq.s32.totalorder %s18, 0
    %p60 = por %p58, %p59
    %p61 = scmp.ne.s32.totalorder %s49, %s50
    %p62 = scmp.eq.s32.totalorder %s19, 1
    %p63 = por %p61, %p62
    %p65 = scmp.ne.s32.totalorder %s50, %s64
    %p66 = scmp.eq.s32.totalorder %s19, 0
    %p67 = por %p65, %p66
    %s69 = sadd.s32 %s68, 1
    %p72 = scmp.eq.s32.totalorder %s13, 1
    %p73 = scmp.ne.s32.totalorder %s68, %s70
    %p74 = scmp.eq.s32.totalorder %s13, 0
    %p75 = por %p73, %p74
    %p76 = scmp.ne.s32.totalorder %s68, %s70
    %p77 = scmp.eq.s32.totalorder %s18, 1
    %p78 = por %p76, %p77
    %p79 = scmp.ne.s32.totalorder %s70, %s71
    %p80 = scmp.eq.s32.totalorder %s18, 0
    %p81 = por %p79, %p80
    %p82 = scmp.ne.s32.totalorder %s70, %s71
    %p83 = scmp.eq.s32.totalorder %s19, 1
    %p84 = por %p82, %p83
    %p86 = scmp.ne.s32.totalorder %s71, %s85
    %p87 = scmp.eq.s32.totalorder %s19, 0
    %p88 = por %p86, %p87
    %s90 = sadd.s32 %s89, 1
    %p93 = scmp.eq.s32.totalorder %s13, 1
    %p94 = scmp.ne.s32.totalorder %s89, %s91
    %p95 = scmp.eq.s32.totalorder %s13, 0
    %p96 = por %p94, %p95
    %p97 = scmp.ne.s32.totalorder %s89, %s91
    %p98 = scmp.eq.s32.totalorder %s18, 1
    %p99 = por %p97, %p98
    %p100 = scmp.ne.s32.totalorder %s91, %s92
    %p101 = scmp.eq.s32.totalorder %s18, 0
    %p102 = por %p100, %p101
    %p103 = scmp.ne.s32.totalorder %s91, %s92
    %p104 = scmp.eq.s32.totalorder %s19, 1
    %p105 = por %p103, %p104
    %p107 = scmp.ne.s32.totalorder %s92, %s106
    %p108 = scmp.eq.s32.totalorder %s19, 0
    %p109 = por %p107, %p108
    %s111 = sadd.s32 %s110, 1
    %p114 = scmp.eq.s32.totalorder %s13, 1
    %p115 = scmp.ne.s32.totalorder %s110, %s112
    %p116 = scmp.eq.s32.totalorder %s13, 0
    %p117 = por %p115, %p116
    %p118 = scmp.ne.s32.totalorder %s110, %s112
    %p119 = scmp.eq.s32.totalorder %s18, 1
    %p120 = por %p118, %p119
    %p121 = scmp.ne.s32.totalorder %s112, %s113
    %p122 = scmp.eq.s32.totalorder %s18, 0
    %p123 = por %p121, %p122
    %p124 = scmp.ne.s32.totalorder %s112, %s113
    %p125 = scmp.eq.s32.totalorder %s19, 1
    %p126 = por %p124, %p125
    %p128 = scmp.ne.s32.totalorder %s113, %s127
    %p129 = scmp.eq.s32.totalorder %s19, 0
    %p130 = por %p128, %p129
    %s131 = ssub.s32 %s13, %s20
    %p132 = scmp.eq.s32.totalorder %s131, 0
    %s134 = sadd.s32 %s133, 1
    %s135 = scalar_select %p132, %s133, %s134
    %p138 = pneg %p132
    %p139 = scmp.eq.s32.totalorder %s13, 1
    %p140 = por %p138, %p139
    %p141 = scmp.ne.s32.totalorder %s133, %s136
    %p142 = scmp.eq.s32.totalorder %s13, 0
    %p143 = por %p141, %p142
    %p144 = scmp.ne.s32.totalorder %s133, %s136
    %p145 = scmp.eq.s32.totalorder %s18, 1
    %p146 = por %p144, %p145
    %p147 = scmp.ne.s32.totalorder %s136, %s137
    %p148 = scmp.eq.s32.totalorder %s18, 0
    %p149 = por %p147, %p148
    %p150 = scmp.ne.s32.totalorder %s136, %s137
    %p151 = scmp.eq.s32.totalorder %s19, 1
    %p152 = por %p150, %p151
    %p154 = scmp.ne.s32.totalorder %s137, %s153
    %p155 = scmp.eq.s32.totalorder %s19, 0
    %p156 = por %p154, %p155
    %s157 = ssub.s32 %s13, %s20
    %p158 = scmp.eq.s32.totalorder %s157, 0
    %s160 = sadd.s32 %s159, 1
    %s161 = scalar_select %p158, %s159, %s160
    %p164 = pneg %p158
    %p165 = scmp.eq.s32.totalorder %s13, 1
    %p166 = por %p164, %p165
    %p167 = scmp.ne.s32.totalorder %s159, %s162
    %p168 = scmp.eq.s32.totalorder %s13, 0
    %p169 = por %p167, %p168
    %p170 = scmp.ne.s32.totalorder %s159, %s162
    %p171 = scmp.eq.s32.totalorder %s18, 1
    %p172 = por %p170, %p171
    %p173 = scmp.ne.s32.totalorder %s162, %s163
    %p174 = scmp.eq.s32.totalorder %s18, 0
    %p175 = por %p173, %p174
    %p176 = scmp.ne.s32.totalorder %s162, %s163
    %p177 = scmp.eq.s32.totalorder %s19, 1
    %p178 = por %p176, %p177
    %p180 = scmp.ne.s32.totalorder %s163, %s179
    %p181 = scmp.eq.s32.totalorder %s19, 0
    %p182 = por %p180, %p181
    %p183 = scmp.le.s32.totalorder 1, %s13
    %p184 = scmp.lt.s32.totalorder %s13, 3
    %p185 = pnand %p183, %p184
    %p186 = pneg %p185
    // Predicated region
    $region9: #{apply_node_func.4} parent=5 // pred_check
      _
    $region10: #{apply_node_func.4} parent=5 // pred_check_branch
      %188 = sbr.rel (%p185) target = $region12
    $region11: #{apply_node_func.4} parent=5 // pred_region
      %s189 = ssub.s32 %s13, 1
      // Predicated region
      $region13: #{apply_node_func.4} parent=11 // pred_check
        %p190 = pneg %p60
      $region14: #{apply_node_func.4} parent=11 // pred_check_branch
        %192 = sbr.rel (%p190) target = $region16
      $region15: #{apply_node_func.4} parent=11 // pred_region
        _
      $region16: #{apply_node_func.4} parent=11 // pred_fallthru
        _
      // Predicated region
      $region17: #{apply_node_func.4} parent=11 // pred_check
        %p193 = pneg %p81
      $region18: #{apply_node_func.4} parent=11 // pred_check_branch
        %195 = sbr.rel (%p193) target = $region20
      $region19: #{apply_node_func.4} parent=11 // pred_region
        _
      $region20: #{apply_node_func.4} parent=11 // pred_fallthru
        _
      // Predicated region
      $region21: #{apply_node_func.4} parent=11 // pred_check
        %p196 = pneg %p102
      $region22: #{apply_node_func.4} parent=11 // pred_check_branch
        %198 = sbr.rel (%p196) target = $region24
      $region23: #{apply_node_func.4} parent=11 // pred_region
        _
      $region24: #{apply_node_func.4} parent=11 // pred_fallthru
        _
      // Predicated region
      $region25: #{apply_node_func.4} parent=11 // pred_check
        %p199 = pneg %p123
      $region26: #{apply_node_func.4} parent=11 // pred_check_branch
        %201 = sbr.rel (%p199) target = $region28
      $region27: #{apply_node_func.4} parent=11 // pred_region
        _
      $region28: #{apply_node_func.4} parent=11 // pred_fallthru
        _
    $region12: #{apply_node_func.4} parent=5 // pred_fallthru
      _
    %p202 = scmp.lt.s32.totalorder %s13, 2
    // Predicated region
    $region29: #{apply_node_func.4} parent=5 // pred_check
      %p203 = pneg %p202
    $region30: #{apply_node_func.4} parent=5 // pred_check_branch
      %205 = sbr.rel (%p203) target = $region32
    $region31: #{apply_node_func.4} parent=5 // pred_region
      // Predicated region
      $region33: #{apply_node_func.4} parent=31 // pred_check
        %p206 = pneg %p33
      $region34: #{apply_node_func.4} parent=31 // pred_check_branch
        %208 = sbr.rel (%p206) target = $region36
      $region35: #{apply_node_func.4} parent=31 // pred_region
        %s209 = smul.u32 32, %s13
        %p210 = scmp.lt.s32.totalorder %s209, 63
        %s211 = scalar_select %p210, %s209, 63
        %s212 = smul.addr %s211, 4
        %s213 = scalar_lea.vmem %s0, %s212
        %s214 = smul.u32 32, %s13
      $region36: #{apply_node_func.4} parent=31 // pred_fallthru
        _
    $region32: #{apply_node_func.4} parent=5 // pred_fallthru
      _
    %p215 = scmp.le.s32.totalorder 1, %s13
    %p216 = scmp.lt.s32.totalorder %s13, 3
    %p217 = pnand %p215, %p216
    %p218 = pneg %p217
    // Predicated region
    $region37: #{apply_node_func.4} parent=5 // pred_check
      _
    $region38: #{apply_node_func.4} parent=5 // pred_check_branch
      %220 = sbr.rel (%p217) target = $region40
    $region39: #{apply_node_func.4} parent=5 // pred_region
      %s221 = ssub.s32 %s13, 1
      %s222 = smul.u32 32, %s18
      %p223 = scmp.lt.s32.totalorder %s222, 63
      %s224 = scalar_select %p223, %s222, 63
      %s225 = smul.addr %s224, 4
      %s226 = scalar_lea.vmem %s0, %s225
      %p227 = pneg %p39
      %p228 = pneg %p36
      %p229 = pneg %p60
      %p230 = pneg %p57
      %p231 = pneg %p81
      %p232 = pneg %p78
      %p233 = pneg %p102
      %p234 = pneg %p99
      %p235 = pneg %p123
      %p236 = pneg %p120
      %p237 = pneg %p149
      %p238 = pneg %p146
      %s239 = smul.u32 32, %s18
      %p240 = scmp.lt.s32.totalorder %s239, 63
      %s241 = scalar_select %p240, %s239, 63
      %s242 = smul.addr %s241, 4
      %s243 = scalar_lea.vmem %s5, %s242
      %p244 = pneg %p175
      %p245 = pneg %p172
      %p246 = scmp.lt.s32.totalorder %s18, 1
      %s247 = scalar_select %p246, %s18, 1
      %s248 = smul.addr %s247, 2
      %s249 = scalar_lea.vmem %s6, %s248
      %s250 = smul.u32 32, %s18
      %p251 = scmp.lt.s32.totalorder %s250, 63
      %s252 = scalar_select %p251, %s250, 63
      %s253 = smul.addr %s252, 4
      %s254 = scalar_lea.vmem %s0, %s253
      %s255 = smul.u32 32, %s18
      %s256 = smul.u32 32, %s18
      %p257 = scmp.lt.s32.totalorder %s256, 63
      %s258 = scalar_select %p257, %s256, 63
      %s259 = smul.addr %s258, 4
      %s260 = scalar_lea.vmem %s5, %s259
      %s261 = smul.u32 32, %s18
      %p262 = scmp.lt.s32.totalorder %s18, 1
      %s263 = scalar_select %p262, %s18, 1
      %s264 = smul.addr %s263, 2
      %s265 = scalar_lea.vmem %s6, %s264
      %v267 = vld [vmem:[%s254] sm:$0xf]
      %v268 = vld [vmem:[%s254 + $0x4] sm:$0xf]
      %v269 = vld [vmem:[%s254 + $0x8] sm:$0xf]
      %v270 = vld [vmem:[%s254 + $0xc] sm:$0xf]
      %v271 = vld [vmem:[%s254 + $0x10] sm:$0xf]
      %v272 = vld [vmem:[%s254 + $0x14] sm:$0xf]
      %v273 = vld [vmem:[%s254 + $0x18] sm:$0xf]
      %v274 = vld [vmem:[%s254 + $0x1c] sm:$0xf]
      %v275 = vld [vmem:[%s254 + $0x20] sm:$0xf]
      %v276 = vld [vmem:[%s254 + $0x24] sm:$0xf]
      %v277 = vld [vmem:[%s254 + $0x28] sm:$0xf]
      %v278 = vld [vmem:[%s254 + $0x2c] sm:$0xf]
      %v279 = vld [vmem:[%s254 + $0x30] sm:$0xf]
      %v280 = vld [vmem:[%s254 + $0x34] sm:$0xf]
      %v281 = vld [vmem:[%s254 + $0x38] sm:$0xf]
      %v282 = vld [vmem:[%s254 + $0x3c] sm:$0xf]
      %v283 = vld [vmem:[%s254 + $0x40] sm:$0xf]
      %v284 = vld [vmem:[%s254 + $0x44] sm:$0xf]
      %v285 = vld [vmem:[%s254 + $0x48] sm:$0xf]
      %v286 = vld [vmem:[%s254 + $0x4c] sm:$0xf]
      %v287 = vld [vmem:[%s254 + $0x50] sm:$0xf]
      %v288 = vld [vmem:[%s254 + $0x54] sm:$0xf]
      %v289 = vld [vmem:[%s254 + $0x58] sm:$0xf]
      %v290 = vld [vmem:[%s254 + $0x5c] sm:$0xf]
      %v291 = vld [vmem:[%s254 + $0x60] sm:$0xf]
      %v292 = vld [vmem:[%s254 + $0x64] sm:$0xf]
      %v293 = vld [vmem:[%s254 + $0x68] sm:$0xf]
      %v294 = vld [vmem:[%s254 + $0x6c] sm:$0xf]
      %v295 = vld [vmem:[%s254 + $0x70] sm:$0xf]
      %v296 = vld [vmem:[%s254 + $0x74] sm:$0xf]
      %v297 = vld [vmem:[%s254 + $0x78] sm:$0xf]
      %v298 = vld [vmem:[%s254 + $0x7c] sm:$0xf]
      %v299 = vld [vmem:[%s1] sm:$0xff]
      %v300 = vld [vmem:[%s1 + $0x8] sm:$0xff]
      %v301 = vld [vmem:[%s1 + $0x10] sm:$0xff]
      %v302 = vld [vmem:[%s1 + $0x18] sm:$0xff]
      %v303 = vld [vmem:[%s1 + $0x20] sm:$0xff]
      %v304 = vld [vmem:[%s1 + $0x28] sm:$0xff]
      %v305 = vld [vmem:[%s1 + $0x30] sm:$0xff]
      %v306 = vld [vmem:[%s1 + $0x38] sm:$0xff]
      %v307 = vld [vmem:[%s1 + $0x40] sm:$0xff]
      %v308 = vld [vmem:[%s1 + $0x48] sm:$0xff]
      %v309 = vld [vmem:[%s1 + $0x50] sm:$0xff]
      %v310 = vld [vmem:[%s1 + $0x58] sm:$0xff]
      %v311 = vld [vmem:[%s1 + $0x60] sm:$0xff]
      %v312 = vld [vmem:[%s1 + $0x68] sm:$0xff]
      %v313 = vld [vmem:[%s1 + $0x70] sm:$0xff]
      %v314 = vld [vmem:[%s1 + $0x78] sm:$0xff]
      %v347 = vunpack.c.l.b16 %v267
      %v348 = vunpack.c.l.b16 %v268
      %v349 = vunpack.c.l.b16 %v269
      %v350 = vunpack.c.l.b16 %v270
      %v351 = vunpack.c.l.b16 %v271
      %v352 = vunpack.c.l.b16 %v272
      %v353 = vunpack.c.l.b16 %v273
      %v354 = vunpack.c.l.b16 %v274
      %v355 = vunpack.c.l.b16 %v275
      %v356 = vunpack.c.l.b16 %v276
      %v357 = vunpack.c.l.b16 %v277
      %v358 = vunpack.c.l.b16 %v278
      %v359 = vunpack.c.l.b16 %v279
      %v360 = vunpack.c.l.b16 %v280
      %v361 = vunpack.c.l.b16 %v281
      %v362 = vunpack.c.l.b16 %v282
      %v363 = vunpack.c.l.b16 %v283
      %v364 = vunpack.c.l.b16 %v284
      %v365 = vunpack.c.l.b16 %v285
      %v366 = vunpack.c.l.b16 %v286
      %v367 = vunpack.c.l.b16 %v287
      %v368 = vunpack.c.l.b16 %v288
      %v369 = vunpack.c.l.b16 %v289
      %v370 = vunpack.c.l.b16 %v290
      %v371 = vunpack.c.l.b16 %v291
      %v372 = vunpack.c.l.b16 %v292
      %v373 = vunpack.c.l.b16 %v293
      %v374 = vunpack.c.l.b16 %v294
      %v375 = vunpack.c.l.b16 %v295
      %v376 = vunpack.c.l.b16 %v296
      %v377 = vunpack.c.l.b16 %v297
      %v378 = vunpack.c.l.b16 %v298
      %v379 = vpack.c.b16 %v348, %v347
      %v380 = vpack.c.b16 %v350, %v349
      %v381 = vpack.c.b16 %v352, %v351
      %v382 = vpack.c.b16 %v354, %v353
      %v383 = vpack.c.b16 %v356, %v355
      %v384 = vpack.c.b16 %v358, %v357
      %v385 = vpack.c.b16 %v360, %v359
      %v386 = vpack.c.b16 %v362, %v361
      %v387 = vpack.c.b16 %v364, %v363
      %v388 = vpack.c.b16 %v366, %v365
      %v389 = vpack.c.b16 %v368, %v367
      %v390 = vpack.c.b16 %v370, %v369
      %v391 = vpack.c.b16 %v372, %v371
      %v392 = vpack.c.b16 %v374, %v373
      %v393 = vpack.c.b16 %v376, %v375
      %v394 = vpack.c.b16 %v378, %v377
      %v427 = vunpack.c.l.b16 %v299
      %v428 = vunpack.c.h.b16 %v299
      %v429 = vunpack.c.l.b16 %v300
      %v430 = vunpack.c.h.b16 %v300
      %v431 = vunpack.c.l.b16 %v301
      %v432 = vunpack.c.h.b16 %v301
      %v433 = vunpack.c.l.b16 %v302
      %v434 = vunpack.c.h.b16 %v302
      %v435 = vunpack.c.l.b16 %v303
      %v436 = vunpack.c.h.b16 %v303
      %v437 = vunpack.c.l.b16 %v304
      %v438 = vunpack.c.h.b16 %v304
      %v439 = vunpack.c.l.b16 %v305
      %v440 = vunpack.c.h.b16 %v305
      %v441 = vunpack.c.l.b16 %v306
      %v442 = vunpack.c.h.b16 %v306
      %v443 = vunpack.c.l.b16 %v307
      %v444 = vunpack.c.h.b16 %v307
      %v445 = vunpack.c.l.b16 %v308
      %v446 = vunpack.c.h.b16 %v308
      %v447 = vunpack.c.l.b16 %v309
      %v448 = vunpack.c.h.b16 %v309
      %v449 = vunpack.c.l.b16 %v310
      %v450 = vunpack.c.h.b16 %v310
      %v451 = vunpack.c.l.b16 %v311
      %v452 = vunpack.c.h.b16 %v311
      %v453 = vunpack.c.l.b16 %v312
      %v454 = vunpack.c.h.b16 %v312
      %v455 = vunpack.c.l.b16 %v313
      %v456 = vunpack.c.h.b16 %v313
      %v457 = vunpack.c.l.b16 %v314
      %v458 = vunpack.c.h.b16 %v314
      %v459 = vpack.c.b16 %v429, %v427
      %v460 = vpack.c.b16 %v430, %v428
      %v461 = vpack.c.b16 %v433, %v431
      %v462 = vpack.c.b16 %v434, %v432
      %v463 = vpack.c.b16 %v437, %v435
      %v464 = vpack.c.b16 %v438, %v436
      %v465 = vpack.c.b16 %v441, %v439
      %v466 = vpack.c.b16 %v442, %v440
      %v467 = vpack.c.b16 %v445, %v443
      %v468 = vpack.c.b16 %v446, %v444
      %v469 = vpack.c.b16 %v449, %v447
      %v470 = vpack.c.b16 %v450, %v448
      %v471 = vpack.c.b16 %v453, %v451
      %v472 = vpack.c.b16 %v454, %v452
      %v473 = vpack.c.b16 %v457, %v455
      %v474 = vpack.c.b16 %v458, %v456
      %491 = vmatprep.subr.bf16.mxu0 %v460
      %492 = vmatpush1.bf16.msra.mxu0 %v459
      %493 = vmatprep.subr.bf16.mxu0 %v462
      %494 = vmatpush1.bf16.msra.mxu0 %v461
      %495 = vmatprep.subr.bf16.mxu0 %v464
      %496 = vmatpush1.bf16.msra.mxu0 %v463
      %497 = vmatprep.subr.bf16.mxu0 %v466
      %498 = vmatpush1.bf16.msra.mxu0 %v465
      %499 = vmatprep.subr.bf16.mxu0 %v468
      %500 = vmatpush1.bf16.msra.mxu0 %v467
      %501 = vmatprep.subr.bf16.mxu0 %v470
      %502 = vmatpush1.bf16.msra.mxu0 %v469
      %503 = vmatprep.subr.bf16.mxu0 %v472
      %504 = vmatpush1.bf16.msra.mxu0 %v471
      %505 = vmatprep.subr.bf16.mxu0 %v474
      %506 = vmatpush1.bf16.msra.mxu0 %v473
      %507 = vmatprep.subr.bf16.mxu0 0
      %508 = vmatpush1.bf16.msra.mxu0 0
      %509 = vmatprep.subr.bf16.mxu0 0
      %510 = vmatpush1.bf16.msra.mxu0 0
      %511 = vmatprep.subr.bf16.mxu0 0
      %512 = vmatpush1.bf16.msra.mxu0 0
      %513 = vmatprep.subr.bf16.mxu0 0
      %514 = vmatpush1.bf16.msra.mxu0 0
      %515 = vmatprep.subr.bf16.mxu0 0
      %516 = vmatpush1.bf16.msra.mxu0 0
      %517 = vmatprep.subr.bf16.mxu0 0
      %518 = vmatpush1.bf16.msra.mxu0 0
      %519 = vmatprep.subr.bf16.mxu0 0
      %520 = vmatpush1.bf16.msra.mxu0 0
      %521 = vmatprep.subr.bf16.mxu0 0
      %522 = vmatpush1.bf16.msra.mxu0 0
      %523 = vmatprep.mubr.bf16.mxu0 0
      %524 = vmatmul.mubr.bf16.gmra.mrb[0].mxu0 %v379
      %v525 = vpop.f32.mrb[0].mxu0
      %v526 = vadd.f32 0.0, %v525
      %v527 = vpop.f32.mrb[0].mxu0
      %v528 = vadd.f32 0.0, %v527
      %v529 = vpop.f32.mrb[0].mxu0
      %v530 = vadd.f32 0.0, %v529
      %v531 = vpop.f32.mrb[0].mxu0
      %v532 = vadd.f32 0.0, %v531
      %533 = vmatprep.mubr.bf16.mxu0 0
      %534 = vmatmul.mubr.bf16.gmra.mrb[0].mxu0 %v380
      %v535 = vpop.f32.mrb[0].mxu0
      %v536 = vadd.f32 0.0, %v535
      %v537 = vpop.f32.mrb[0].mxu0
      %v538 = vadd.f32 0.0, %v537
      %v539 = vpop.f32.mrb[0].mxu0
      %v540 = vadd.f32 0.0, %v539
      %v541 = vpop.f32.mrb[0].mxu0
      %v542 = vadd.f32 0.0, %v541
      %543 = vmatprep.mubr.bf16.mxu0 0
      %544 = vmatmul.mubr.bf16.gmra.mrb[0].mxu0 %v381
      %v545 = vpop.f32.mrb[0].mxu0
      %v546 = vadd.f32 0.0, %v545
      %v547 = vpop.f32.mrb[0].mxu0
      %v548 = vadd.f32 0.0, %v547
      %v549 = vpop.f32.mrb[0].mxu0
      %v550 = vadd.f32 0.0, %v549
      %v551 = vpop.f32.mrb[0].mxu0
      %v552 = vadd.f32 0.0, %v551
      %553 = vmatprep.mubr.bf16.mxu0 0
      %554 = vmatmul.mubr.bf16.gmra.mrb[0].mxu0 %v382
      %v555 = vpop.f32.mrb[0].mxu0
      %v556 = vadd.f32 0.0, %v555
      %v557 = vpop.f32.mrb[0].mxu0
      %v558 = vadd.f32 0.0, %v557
      %v559 = vpop.f32.mrb[0].mxu0
      %v560 = vadd.f32 0.0, %v559
      %v561 = vpop.f32.mrb[0].mxu0
      %v562 = vadd.f32 0.0, %v561
      %563 = vmatprep.mubr.bf16.mxu0 0
      %564 = vmatmul.mubr.bf16.gmra.mrb[0].mxu0 %v383
      %v565 = vpop.f32.mrb[0].mxu0
      %v566 = vadd.f32 0.0, %v565
      %v567 = vpop.f32.mrb[0].mxu0
      %v568 = vadd.f32 0.0, %v567
      %v569 = vpop.f32.mrb[0].mxu0
      %v570 = vadd.f32 0.0, %v569
      %v571 = vpop.f32.mrb[0].mxu0
      %v572 = vadd.f32 0.0, %v571
      %573 = vmatprep.mubr.bf16.mxu0 0
      %574 = vmatmul.mubr.bf16.gmra.mrb[0].mxu0 %v384
      %v575 = vpop.f32.mrb[0].mxu0
      %v576 = vadd.f32 0.0, %v575
      %v577 = vpop.f32.mrb[0].mxu0
      %v578 = vadd.f32 0.0, %v577
      %v579 = vpop.f32.mrb[0].mxu0
      %v580 = vadd.f32 0.0, %v579
      %v581 = vpop.f32.mrb[0].mxu0
      %v582 = vadd.f32 0.0, %v581
      %583 = vmatprep.mubr.bf16.mxu0 0
      %584 = vmatmul.mubr.bf16.gmra.mrb[0].mxu0 %v385
      %v585 = vpop.f32.mrb[0].mxu0
      %v586 = vadd.f32 0.0, %v585
      %v587 = vpop.f32.mrb[0].mxu0
      %v588 = vadd.f32 0.0, %v587
      %v589 = vpop.f32.mrb[0].mxu0
      %v590 = vadd.f32 0.0, %v589
      %v591 = vpop.f32.mrb[0].mxu0
      %v592 = vadd.f32 0.0, %v591
      %593 = vmatprep.mubr.bf16.mxu0 0
      %594 = vmatmul.mubr.bf16.gmra.mrb[0].mxu0 %v386
      %v595 = vpop.f32.mrb[0].mxu0
      %v596 = vadd.f32 0.0, %v595
      %v597 = vpop.f32.mrb[0].mxu0
      %v598 = vadd.f32 0.0, %v597
      %v599 = vpop.f32.mrb[0].mxu0
      %v600 = vadd.f32 0.0, %v599
      %v601 = vpop.f32.mrb[0].mxu0
      %v602 = vadd.f32 0.0, %v601
      %603 = vmatprep.mubr.bf16.mxu0 0
      %604 = vmatmul.mubr.bf16.gmra.mrb[0].mxu0 %v387
      %v605 = vpop.f32.mrb[0].mxu0
      %v606 = vadd.f32 0.0, %v605
      %v607 = vpop.f32.mrb[0].mxu0
      %v608 = vadd.f32 0.0, %v607
      %v609 = vpop.f32.mrb[0].mxu0
      %v610 = vadd.f32 0.0, %v609
      %v611 = vpop.f32.mrb[0].mxu0
      %v612 = vadd.f32 0.0, %v611
      %613 = vmatprep.mubr.bf16.mxu0 0
      %614 = vmatmul.mubr.bf16.gmra.mrb[0].mxu0 %v388
      %v615 = vpop.f32.mrb[0].mxu0
      %v616 = vadd.f32 0.0, %v615
      %v617 = vpop.f32.mrb[0].mxu0
      %v618 = vadd.f32 0.0, %v617
      %v619 = vpop.f32.mrb[0].mxu0
      %v620 = vadd.f32 0.0, %v619
      %v621 = vpop.f32.mrb[0].mxu0
      %v622 = vadd.f32 0.0, %v621
      %623 = vmatprep.mubr.bf16.mxu0 0
      %624 = vmatmul.mubr.bf16.gmra.mrb[0].mxu0 %v389
      %v625 = vpop.f32.mrb[0].mxu0
      %v626 = vadd.f32 0.0, %v625
      %v627 = vpop.f32.mrb[0].mxu0
      %v628 = vadd.f32 0.0, %v627
      %v629 = vpop.f32.mrb[0].mxu0
      %v630 = vadd.f32 0.0, %v629
      %v631 = vpop.f32.mrb[0].mxu0
      %v632 = vadd.f32 0.0, %v631
      %633 = vmatprep.mubr.bf16.mxu0 0
      %634 = vmatmul.mubr.bf16.gmra.mrb[0].mxu0 %v390
      %v635 = vpop.f32.mrb[0].mxu0
      %v636 = vadd.f32 0.0, %v635
      %v637 = vpop.f32.mrb[0].mxu0
      %v638 = vadd.f32 0.0, %v637
      %v639 = vpop.f32.mrb[0].mxu0
      %v640 = vadd.f32 0.0, %v639
      %v641 = vpop.f32.mrb[0].mxu0
      %v642 = vadd.f32 0.0, %v641
      %643 = vmatprep.mubr.bf16.mxu0 0
      %644 = vmatmul.mubr.bf16.gmra.mrb[0].mxu0 %v391
      %v645 = vpop.f32.mrb[0].mxu0
      %v646 = vadd.f32 0.0, %v645
      %v647 = vpop.f32.mrb[0].mxu0
      %v648 = vadd.f32 0.0, %v647
      %v649 = vpop.f32.mrb[0].mxu0
      %v650 = vadd.f32 0.0, %v649
      %v651 = vpop.f32.mrb[0].mxu0
      %v652 = vadd.f32 0.0, %v651
      %653 = vmatprep.mubr.bf16.mxu0 0
      %654 = vmatmul.mubr.bf16.gmra.mrb[0].mxu0 %v392
      %v655 = vpop.f32.mrb[0].mxu0
      %v656 = vadd.f32 0.0, %v655
      %v657 = vpop.f32.mrb[0].mxu0
      %v658 = vadd.f32 0.0, %v657
      %v659 = vpop.f32.mrb[0].mxu0
      %v660 = vadd.f32 0.0, %v659
      %v661 = vpop.f32.mrb[0].mxu0
      %v662 = vadd.f32 0.0, %v661
      %663 = vmatprep.mubr.bf16.mxu0 0
      %664 = vmatmul.mubr.bf16.gmra.mrb[0].mxu0 %v393
      %v665 = vpop.f32.mrb[0].mxu0
      %v666 = vadd.f32 0.0, %v665
      %v667 = vpop.f32.mrb[0].mxu0
      %v668 = vadd.f32 0.0, %v667
      %v669 = vpop.f32.mrb[0].mxu0
      %v670 = vadd.f32 0.0, %v669
      %v671 = vpop.f32.mrb[0].mxu0
      %v672 = vadd.f32 0.0, %v671
      %673 = vmatprep.mubr.bf16.mxu0 0
      %674 = vmatmul.mubr.bf16.gmra.mrb[0].mxu0 %v394
      %v675 = vpop.f32.mrb[0].mxu0
      %v676 = vadd.f32 0.0, %v675
      %v677 = vpop.f32.mrb[0].mxu0
      %v678 = vadd.f32 0.0, %v677
      %v679 = vpop.f32.mrb[0].mxu0
      %v680 = vadd.f32 0.0, %v679
      %v681 = vpop.f32.mrb[0].mxu0
      %v682 = vadd.f32 0.0, %v681
      %683 = vdwg.mxu0
      %v684 = vld [vmem:[%s2] sm:$0x3]
      %v686 = vlaneseq
      %v687 = vshrl.u32 %v686, 7
      %v688 = vsub.s32 0, %v687
      %v689 = vrot.slane %v684, %v688
      %v690 = vlaneseq
      %v691 = vshrl.u32 %v690, 7
      %v692 = vsub.s32 1, %v691
      %v693 = vrot.slane %v684, %v692
      %v696 = vmul.f32 %v526, %v689
      %v697 = vmul.f32 %v528, %v693
      %v698 = vmul.f32 %v530, %v689
      %v699 = vmul.f32 %v532, %v693
      %v700 = vmul.f32 %v536, %v689
      %v701 = vmul.f32 %v538, %v693
      %v702 = vmul.f32 %v540, %v689
      %v703 = vmul.f32 %v542, %v693
      %v704 = vmul.f32 %v546, %v689
      %v705 = vmul.f32 %v548, %v693
      %v706 = vmul.f32 %v550, %v689
      %v707 = vmul.f32 %v552, %v693
      %v708 = vmul.f32 %v556, %v689
      %v709 = vmul.f32 %v558, %v693
      %v710 = vmul.f32 %v560, %v689
      %v711 = vmul.f32 %v562, %v693
      %v712 = vmul.f32 %v566, %v689
      %v713 = vmul.f32 %v568, %v693
      %v714 = vmul.f32 %v570, %v689
      %v715 = vmul.f32 %v572, %v693
      %v716 = vmul.f32 %v576, %v689
      %v717 = vmul.f32 %v578, %v693
      %v718 = vmul.f32 %v580, %v689
      %v719 = vmul.f32 %v582, %v693
      %v720 = vmul.f32 %v586, %v689
      %v721 = vmul.f32 %v588, %v693
      %v722 = vmul.f32 %v590, %v689
      %v723 = vmul.f32 %v592, %v693
      %v724 = vmul.f32 %v596, %v689
      %v725 = vmul.f32 %v598, %v693
      %v726 = vmul.f32 %v600, %v689
      %v727 = vmul.f32 %v602, %v693
      %v728 = vmul.f32 %v606, %v689
      %v729 = vmul.f32 %v608, %v693
      %v730 = vmul.f32 %v610, %v689
      %v731 = vmul.f32 %v612, %v693
      %v732 = vmul.f32 %v616, %v689
      %v733 = vmul.f32 %v618, %v693
      %v734 = vmul.f32 %v620, %v689
      %v735 = vmul.f32 %v622, %v693
      %v736 = vmul.f32 %v626, %v689
      %v737 = vmul.f32 %v628, %v693
      %v738 = vmul.f32 %v630, %v689
      %v739 = vmul.f32 %v632, %v693
      %v740 = vmul.f32 %v636, %v689
      %v741 = vmul.f32 %v638, %v693
      %v742 = vmul.f32 %v640, %v689
      %v743 = vmul.f32 %v642, %v693
      %v744 = vmul.f32 %v646, %v689
      %v745 = vmul.f32 %v648, %v693
      %v746 = vmul.f32 %v650, %v689
      %v747 = vmul.f32 %v652, %v693
      %v748 = vmul.f32 %v656, %v689
      %v749 = vmul.f32 %v658, %v693
      %v750 = vmul.f32 %v660, %v689
      %v751 = vmul.f32 %v662, %v693
      %v752 = vmul.f32 %v666, %v689
      %v753 = vmul.f32 %v668, %v693
      %v754 = vmul.f32 %v670, %v689
      %v755 = vmul.f32 %v672, %v693
      %v756 = vmul.f32 %v676, %v689
      %v757 = vmul.f32 %v678, %v693
      %v758 = vmul.f32 %v680, %v689
      %v759 = vmul.f32 %v682, %v693
      %v760 = vld [vmem:[%s3] sm:$0x3]
      %v762 = vlaneseq
      %v763 = vshrl.u32 %v762, 7
      %v764 = vsub.s32 0, %v763
      %v765 = vrot.slane %v760, %v764
      %v766 = vlaneseq
      %v767 = vshrl.u32 %v766, 7
      %v768 = vsub.s32 1, %v767
      %v769 = vrot.slane %v760, %v768
      %v772 = vadd.f32 %v696, %v765
      %v773 = vadd.f32 %v697, %v769
      %v774 = vadd.f32 %v698, %v765
      %v775 = vadd.f32 %v699, %v769
      %v776 = vadd.f32 %v700, %v765
      %v777 = vadd.f32 %v701, %v769
      %v778 = vadd.f32 %v702, %v765
      %v779 = vadd.f32 %v703, %v769
      %v780 = vadd.f32 %v704, %v765
      %v781 = vadd.f32 %v705, %v769
      %v782 = vadd.f32 %v706, %v765
      %v783 = vadd.f32 %v707, %v769
      %v784 = vadd.f32 %v708, %v765
      %v785 = vadd.f32 %v709, %v769
      %v786 = vadd.f32 %v710, %v765
      %v787 = vadd.f32 %v711, %v769
      %v788 = vadd.f32 %v712, %v765
      %v789 = vadd.f32 %v713, %v769
      %v790 = vadd.f32 %v714, %v765
      %v791 = vadd.f32 %v715, %v769
      %v792 = vadd.f32 %v716, %v765
      %v793 = vadd.f32 %v717, %v769
      %v794 = vadd.f32 %v718, %v765
      %v795 = vadd.f32 %v719, %v769
      %v796 = vadd.f32 %v720, %v765
      %v797 = vadd.f32 %v721, %v769
      %v798 = vadd.f32 %v722, %v765
      %v799 = vadd.f32 %v723, %v769
      %v800 = vadd.f32 %v724, %v765
      %v801 = vadd.f32 %v725, %v769
      %v802 = vadd.f32 %v726, %v765
      %v803 = vadd.f32 %v727, %v769
      %v804 = vadd.f32 %v728, %v765
      %v805 = vadd.f32 %v729, %v769
      %v806 = vadd.f32 %v730, %v765
      %v807 = vadd.f32 %v731, %v769
      %v808 = vadd.f32 %v732, %v765
      %v809 = vadd.f32 %v733, %v769
      %v810 = vadd.f32 %v734, %v765
      %v811 = vadd.f32 %v735, %v769
      %v812 = vadd.f32 %v736, %v765
      %v813 = vadd.f32 %v737, %v769
      %v814 = vadd.f32 %v738, %v765
      %v815 = vadd.f32 %v739, %v769
      %v816 = vadd.f32 %v740, %v765
      %v817 = vadd.f32 %v741, %v769
      %v818 = vadd.f32 %v742, %v765
      %v819 = vadd.f32 %v743, %v769
      %v820 = vadd.f32 %v744, %v765
      %v821 = vadd.f32 %v745, %v769
      %v822 = vadd.f32 %v746, %v765
      %v823 = vadd.f32 %v747, %v769
      %v824 = vadd.f32 %v748, %v765
      %v825 = vadd.f32 %v749, %v769
      %v826 = vadd.f32 %v750, %v765
      %v827 = vadd.f32 %v751, %v769
      %v828 = vadd.f32 %v752, %v765
      %v829 = vadd.f32 %v753, %v769
      %v830 = vadd.f32 %v754, %v765
      %v831 = vadd.f32 %v755, %v769
      %v832 = vadd.f32 %v756, %v765
      %v833 = vadd.f32 %v757, %v769
      %v834 = vadd.f32 %v758, %v765
      %v835 = vadd.f32 %v759, %v769
      %v836 = vmax.f32 %v772, 0.0
      %v837 = vmax.f32 %v773, 0.0
      %v838 = vmax.f32 %v774, 0.0
      %v839 = vmax.f32 %v775, 0.0
      %v840 = vmax.f32 %v776, 0.0
      %v841 = vmax.f32 %v777, 0.0
      %v842 = vmax.f32 %v778, 0.0
      %v843 = vmax.f32 %v779, 0.0
      %v844 = vmax.f32 %v780, 0.0
      %v845 = vmax.f32 %v781, 0.0
      %v846 = vmax.f32 %v782, 0.0
      %v847 = vmax.f32 %v783, 0.0
      %v848 = vmax.f32 %v784, 0.0
      %v849 = vmax.f32 %v785, 0.0
      %v850 = vmax.f32 %v786, 0.0
      %v851 = vmax.f32 %v787, 0.0
      %v852 = vmax.f32 %v788, 0.0
      %v853 = vmax.f32 %v789, 0.0
      %v854 = vmax.f32 %v790, 0.0
      %v855 = vmax.f32 %v791, 0.0
      %v856 = vmax.f32 %v792, 0.0
      %v857 = vmax.f32 %v793, 0.0
      %v858 = vmax.f32 %v794, 0.0
      %v859 = vmax.f32 %v795, 0.0
      %v860 = vmax.f32 %v796, 0.0
      %v861 = vmax.f32 %v797, 0.0
      %v862 = vmax.f32 %v798, 0.0
      %v863 = vmax.f32 %v799, 0.0
      %v864 = vmax.f32 %v800, 0.0
      %v865 = vmax.f32 %v801, 0.0
      %v866 = vmax.f32 %v802, 0.0
      %v867 = vmax.f32 %v803, 0.0
      %v868 = vmax.f32 %v804, 0.0
      %v869 = vmax.f32 %v805, 0.0
      %v870 = vmax.f32 %v806, 0.0
      %v871 = vmax.f32 %v807, 0.0
      %v872 = vmax.f32 %v808, 0.0
      %v873 = vmax.f32 %v809, 0.0
      %v874 = vmax.f32 %v810, 0.0
      %v875 = vmax.f32 %v811, 0.0
      %v876 = vmax.f32 %v812, 0.0
      %v877 = vmax.f32 %v813, 0.0
      %v878 = vmax.f32 %v814, 0.0
      %v879 = vmax.f32 %v815, 0.0
      %v880 = vmax.f32 %v816, 0.0
      %v881 = vmax.f32 %v817, 0.0
      %v882 = vmax.f32 %v818, 0.0
      %v883 = vmax.f32 %v819, 0.0
      %v884 = vmax.f32 %v820, 0.0
      %v885 = vmax.f32 %v821, 0.0
      %v886 = vmax.f32 %v822, 0.0
      %v887 = vmax.f32 %v823, 0.0
      %v888 = vmax.f32 %v824, 0.0
      %v889 = vmax.f32 %v825, 0.0
      %v890 = vmax.f32 %v826, 0.0
      %v891 = vmax.f32 %v827, 0.0
      %v892 = vmax.f32 %v828, 0.0
      %v893 = vmax.f32 %v829, 0.0
      %v894 = vmax.f32 %v830, 0.0
      %v895 = vmax.f32 %v831, 0.0
      %v896 = vmax.f32 %v832, 0.0
      %v897 = vmax.f32 %v833, 0.0
      %v898 = vmax.f32 %v834, 0.0
      %v899 = vmax.f32 %v835, 0.0
      %v900 = vpack.c.bf16 %v838, %v836
      %v901 = vpack.c.bf16 %v839, %v837
      %v902 = vpack.c.bf16 %v842, %v840
      %v903 = vpack.c.bf16 %v843, %v841
      %v904 = vpack.c.bf16 %v846, %v844
      %v905 = vpack.c.bf16 %v847, %v845
      %v906 = vpack.c.bf16 %v850, %v848
      %v907 = vpack.c.bf16 %v851, %v849
      %v908 = vpack.c.bf16 %v854, %v852
      %v909 = vpack.c.bf16 %v855, %v853
      %v910 = vpack.c.bf16 %v858, %v856
      %v911 = vpack.c.bf16 %v859, %v857
      %v912 = vpack.c.bf16 %v862, %v860
      %v913 = vpack.c.bf16 %v863, %v861
      %v914 = vpack.c.bf16 %v866, %v864
      %v915 = vpack.c.bf16 %v867, %v865
      %v916 = vpack.c.bf16 %v870, %v868
      %v917 = vpack.c.bf16 %v871, %v869
      %v918 = vpack.c.bf16 %v874, %v872
      %v919 = vpack.c.bf16 %v875, %v873
      %v920 = vpack.c.bf16 %v878, %v876
      %v921 = vpack.c.bf16 %v879, %v877
      %v922 = vpack.c.bf16 %v882, %v880
      %v923 = vpack.c.bf16 %v883, %v881
      %v924 = vpack.c.bf16 %v886, %v884
      %v925 = vpack.c.bf16 %v887, %v885
      %v926 = vpack.c.bf16 %v890, %v888
      %v927 = vpack.c.bf16 %v891, %v889
      %v928 = vpack.c.bf16 %v894, %v892
      %v929 = vpack.c.bf16 %v895, %v893
      %v930 = vpack.c.bf16 %v898, %v896
      %v931 = vpack.c.bf16 %v899, %v897
      %v932 = vld [vmem:[%s4] sm:$0xf]
      %v933 = vld [vmem:[%s4 + $0x4] sm:$0xf]
      %v934 = vld [vmem:[%s4 + $0x8] sm:$0xf]
      %v935 = vld [vmem:[%s4 + $0xc] sm:$0xf]
      %v936 = vld [vmem:[%s4 + $0x10] sm:$0xf]
      %v937 = vld [vmem:[%s4 + $0x14] sm:$0xf]
      %v938 = vld [vmem:[%s4 + $0x18] sm:$0xf]
      %v939 = vld [vmem:[%s4 + $0x1c] sm:$0xf]
      %v940 = vld [vmem:[%s4 + $0x20] sm:$0xf]
      %v941 = vld [vmem:[%s4 + $0x24] sm:$0xf]
      %v942 = vld [vmem:[%s4 + $0x28] sm:$0xf]
      %v943 = vld [vmem:[%s4 + $0x2c] sm:$0xf]
      %v944 = vld [vmem:[%s4 + $0x30] sm:$0xf]
      %v945 = vld [vmem:[%s4 + $0x34] sm:$0xf]
      %v946 = vld [vmem:[%s4 + $0x38] sm:$0xf]
      %v947 = vld [vmem:[%s4 + $0x3c] sm:$0xf]
      %v948 = vld [vmem:[%s4 + $0x40] sm:$0xf]
      %v949 = vld [vmem:[%s4 + $0x44] sm:$0xf]
      %v950 = vld [vmem:[%s4 + $0x48] sm:$0xf]
      %v951 = vld [vmem:[%s4 + $0x4c] sm:$0xf]
      %v952 = vld [vmem:[%s4 + $0x50] sm:$0xf]
      %v953 = vld [vmem:[%s4 + $0x54] sm:$0xf]
      %v954 = vld [vmem:[%s4 + $0x58] sm:$0xf]
      %v955 = vld [vmem:[%s4 + $0x5c] sm:$0xf]
      %v956 = vld [vmem:[%s4 + $0x60] sm:$0xf]
      %v957 = vld [vmem:[%s4 + $0x64] sm:$0xf]
      %v958 = vld [vmem:[%s4 + $0x68] sm:$0xf]
      %v959 = vld [vmem:[%s4 + $0x6c] sm:$0xf]
      %v960 = vld [vmem:[%s4 + $0x70] sm:$0xf]
      %v961 = vld [vmem:[%s4 + $0x74] sm:$0xf]
      %v962 = vld [vmem:[%s4 + $0x78] sm:$0xf]
      %v963 = vld [vmem:[%s4 + $0x7c] sm:$0xf]
      %v996 = vunpack.c.l.b16 %v932
      %v997 = vunpack.c.l.b16 %v933
      %v998 = vunpack.c.l.b16 %v934
      %v999 = vunpack.c.l.b16 %v935
      %v1000 = vunpack.c.l.b16 %v936
      %v1001 = vunpack.c.l.b16 %v937
      %v1002 = vunpack.c.l.b16 %v938
      %v1003 = vunpack.c.l.b16 %v939
      %v1004 = vunpack.c.l.b16 %v940
      %v1005 = vunpack.c.l.b16 %v941
      %v1006 = vunpack.c.l.b16 %v942
      %v1007 = vunpack.c.l.b16 %v943
      %v1008 = vunpack.c.l.b16 %v944
      %v1009 = vunpack.c.l.b16 %v945
      %v1010 = vunpack.c.l.b16 %v946
      %v1011 = vunpack.c.l.b16 %v947
      %v1012 = vunpack.c.l.b16 %v948
      %v1013 = vunpack.c.l.b16 %v949
      %v1014 = vunpack.c.l.b16 %v950
      %v1015 = vunpack.c.l.b16 %v951
      %v1016 = vunpack.c.l.b16 %v952
      %v1017 = vunpack.c.l.b16 %v953
      %v1018 = vunpack.c.l.b16 %v954
      %v1019 = vunpack.c.l.b16 %v955
      %v1020 = vunpack.c.l.b16 %v956
      %v1021 = vunpack.c.l.b16 %v957
      %v1022 = vunpack.c.l.b16 %v958
      %v1023 = vunpack.c.l.b16 %v959
      %v1024 = vunpack.c.l.b16 %v960
      %v1025 = vunpack.c.l.b16 %v961
      %v1026 = vunpack.c.l.b16 %v962
      %v1027 = vunpack.c.l.b16 %v963
      %v1028 = vpack.c.b16 %v997, %v996
      %v1029 = vpack.c.b16 %v999, %v998
      %v1030 = vpack.c.b16 %v1001, %v1000
      %v1031 = vpack.c.b16 %v1003, %v1002
      %v1032 = vpack.c.b16 %v1005, %v1004
      %v1033 = vpack.c.b16 %v1007, %v1006
      %v1034 = vpack.c.b16 %v1009, %v1008
      %v1035 = vpack.c.b16 %v1011, %v1010
      %v1036 = vpack.c.b16 %v1013, %v1012
      %v1037 = vpack.c.b16 %v1015, %v1014
      %v1038 = vpack.c.b16 %v1017, %v1016
      %v1039 = vpack.c.b16 %v1019, %v1018
      %v1040 = vpack.c.b16 %v1021, %v1020
      %v1041 = vpack.c.b16 %v1023, %v1022
      %v1042 = vpack.c.b16 %v1025, %v1024
      %v1043 = vpack.c.b16 %v1027, %v1026
      %1060 = vmatprep.subr.bf16.mxu0 0
      %1061 = vmatpush1.bf16.msra.mxu0 %v1028
      %1062 = vmatprep.subr.bf16.mxu0 0
      %1063 = vmatpush1.bf16.msra.mxu0 %v1029
      %1064 = vmatprep.subr.bf16.mxu0 0
      %1065 = vmatpush1.bf16.msra.mxu0 %v1030
      %1066 = vmatprep.subr.bf16.mxu0 0
      %1067 = vmatpush1.bf16.msra.mxu0 %v1031
      %1068 = vmatprep.subr.bf16.mxu0 0
      %1069 = vmatpush1.bf16.msra.mxu0 %v1032
      %1070 = vmatprep.subr.bf16.mxu0 0
      %1071 = vmatpush1.bf16.msra.mxu0 %v1033
      %1072 = vmatprep.subr.bf16.mxu0 0
      %1073 = vmatpush1.bf16.msra.mxu0 %v1034
      %1074 = vmatprep.subr.bf16.mxu0 0
      %1075 = vmatpush1.bf16.msra.mxu0 %v1035
      %1076 = vmatprep.subr.bf16.mxu0 0
      %1077 = vmatpush1.bf16.msra.mxu0 %v1036
      %1078 = vmatprep.subr.bf16.mxu0 0
      %1079 = vmatpush1.bf16.msra.mxu0 %v1037
      %1080 = vmatprep.subr.bf16.mxu0 0
      %1081 = vmatpush1.bf16.msra.mxu0 %v1038
      %1082 = vmatprep.subr.bf16.mxu0 0
      %1083 = vmatpush1.bf16.msra.mxu0 %v1039
      %1084 = vmatprep.subr.bf16.mxu0 0
      %1085 = vmatpush1.bf16.msra.mxu0 %v1040
      %1086 = vmatprep.subr.bf16.mxu0 0
      %1087 = vmatpush1.bf16.msra.mxu0 %v1041
      %1088 = vmatprep.subr.bf16.mxu0 0
      %1089 = vmatpush1.bf16.msra.mxu0 %v1042
      %1090 = vmatprep.subr.bf16.mxu0 0
      %1091 = vmatpush1.bf16.msra.mxu0 %v1043
      %1092 = vmatprep.mubr.bf16.mxu0 %v901
      %1093 = vmatmul.mubr.bf16.gmra.mrb[0].mxu0 %v900
      %v1094 = vpop.f32.mrb[0].mxu0
      %v1095 = vadd.f32 0.0, %v1094
      %v1096 = vpop.f32.mrb[0].mxu0
      %v1097 = vpop.f32.mrb[0].mxu0
      %v1098 = vadd.f32 0.0, %v1097
      %v1099 = vpop.f32.mrb[0].mxu0
      %1100 = vmatprep.mubr.bf16.mxu0 %v903
      %1101 = vmatmul.mubr.bf16.gmra.mrb[0].mxu0 %v902
      %v1102 = vpop.f32.mrb[0].mxu0
      %v1103 = vadd.f32 0.0, %v1102
      %v1104 = vpop.f32.mrb[0].mxu0
      %v1105 = vpop.f32.mrb[0].mxu0
      %v1106 = vadd.f32 0.0, %v1105
      %v1107 = vpop.f32.mrb[0].mxu0
      %1108 = vmatprep.mubr.bf16.mxu0 %v905
      %1109 = vmatmul.mubr.bf16.gmra.mrb[0].mxu0 %v904
      %v1110 = vpop.f32.mrb[0].mxu0
      %v1111 = vadd.f32 0.0, %v1110
      %v1112 = vpop.f32.mrb[0].mxu0
      %v1113 = vpop.f32.mrb[0].mxu0
      %v1114 = vadd.f32 0.0, %v1113
      %v1115 = vpop.f32.mrb[0].mxu0
      %1116 = vmatprep.mubr.bf16.mxu0 %v907
      %1117 = vmatmul.mubr.bf16.gmra.mrb[0].mxu0 %v906
      %v1118 = vpop.f32.mrb[0].mxu0
      %v1119 = vadd.f32 0.0, %v1118
      %v1120 = vpop.f32.mrb[0].mxu0
      %v1121 = vpop.f32.mrb[0].mxu0
      %v1122 = vadd.f32 0.0, %v1121
      %v1123 = vpop.f32.mrb[0].mxu0
      %1124 = vmatprep.mubr.bf16.mxu0 %v909
      %1125 = vmatmul.mubr.bf16.gmra.mrb[0].mxu0 %v908
      %v1126 = vpop.f32.mrb[0].mxu0
      %v1127 = vadd.f32 0.0, %v1126
      %v1128 = vpop.f32.mrb[0].mxu0
      %v1129 = vpop.f32.mrb[0].mxu0
      %v1130 = vadd.f32 0.0, %v1129
      %v1131 = vpop.f32.mrb[0].mxu0
      %1132 = vmatprep.mubr.bf16.mxu0 %v911
      %1133 = vmatmul.mubr.bf16.gmra.mrb[0].mxu0 %v910
      %v1134 = vpop.f32.mrb[0].mxu0
      %v1135 = vadd.f32 0.0, %v1134
      %v1136 = vpop.f32.mrb[0].mxu0
      %v1137 = vpop.f32.mrb[0].mxu0
      %v1138 = vadd.f32 0.0, %v1137
      %v1139 = vpop.f32.mrb[0].mxu0
      %1140 = vmatprep.mubr.bf16.mxu0 %v913
      %1141 = vmatmul.mubr.bf16.gmra.mrb[0].mxu0 %v912
      %v1142 = vpop.f32.mrb[0].mxu0
      %v1143 = vadd.f32 0.0, %v1142
      %v1144 = vpop.f32.mrb[0].mxu0
      %v1145 = vpop.f32.mrb[0].mxu0
      %v1146 = vadd.f32 0.0, %v1145
      %v1147 = vpop.f32.mrb[0].mxu0
      %1148 = vmatprep.mubr.bf16.mxu0 %v915
      %1149 = vmatmul.mubr.bf16.gmra.mrb[0].mxu0 %v914
      %v1150 = vpop.f32.mrb[0].mxu0
      %v1151 = vadd.f32 0.0, %v1150
      %v1152 = vpop.f32.mrb[0].mxu0
      %v1153 = vpop.f32.mrb[0].mxu0
      %v1154 = vadd.f32 0.0, %v1153
      %v1155 = vpop.f32.mrb[0].mxu0
      %1156 = vmatprep.mubr.bf16.mxu0 %v917
      %1157 = vmatmul.mubr.bf16.gmra.mrb[0].mxu0 %v916
      %v1158 = vpop.f32.mrb[0].mxu0
      %v1159 = vadd.f32 0.0, %v1158
      %v1160 = vpop.f32.mrb[0].mxu0
      %v1161 = vpop.f32.mrb[0].mxu0
      %v1162 = vadd.f32 0.0, %v1161
      %v1163 = vpop.f32.mrb[0].mxu0
      %1164 = vmatprep.mubr.bf16.mxu0 %v919
      %1165 = vmatmul.mubr.bf16.gmra.mrb[0].mxu0 %v918
      %v1166 = vpop.f32.mrb[0].mxu0
      %v1167 = vadd.f32 0.0, %v1166
      %v1168 = vpop.f32.mrb[0].mxu0
      %v1169 = vpop.f32.mrb[0].mxu0
      %v1170 = vadd.f32 0.0, %v1169
      %v1171 = vpop.f32.mrb[0].mxu0
      %1172 = vmatprep.mubr.bf16.mxu0 %v921
      %1173 = vmatmul.mubr.bf16.gmra.mrb[0].mxu0 %v920
      %v1174 = vpop.f32.mrb[0].mxu0
      %v1175 = vadd.f32 0.0, %v1174
      %v1176 = vpop.f32.mrb[0].mxu0
      %v1177 = vpop.f32.mrb[0].mxu0
      %v1178 = vadd.f32 0.0, %v1177
      %v1179 = vpop.f32.mrb[0].mxu0
      %1180 = vmatprep.mubr.bf16.mxu0 %v923
      %1181 = vmatmul.mubr.bf16.gmra.mrb[0].mxu0 %v922
      %v1182 = vpop.f32.mrb[0].mxu0
      %v1183 = vadd.f32 0.0, %v1182
      %v1184 = vpop.f32.mrb[0].mxu0
      %v1185 = vpop.f32.mrb[0].mxu0
      %v1186 = vadd.f32 0.0, %v1185
      %v1187 = vpop.f32.mrb[0].mxu0
      %1188 = vmatprep.mubr.bf16.mxu0 %v925
      %1189 = vmatmul.mubr.bf16.gmra.mrb[0].mxu0 %v924
      %v1190 = vpop.f32.mrb[0].mxu0
      %v1191 = vadd.f32 0.0, %v1190
      %v1192 = vpop.f32.mrb[0].mxu0
      %v1193 = vpop.f32.mrb[0].mxu0
      %v1194 = vadd.f32 0.0, %v1193
      %v1195 = vpop.f32.mrb[0].mxu0
      %1196 = vmatprep.mubr.bf16.mxu0 %v927
      %1197 = vmatmul.mubr.bf16.gmra.mrb[0].mxu0 %v926
      %v1198 = vpop.f32.mrb[0].mxu0
      %v1199 = vadd.f32 0.0, %v1198
      %v1200 = vpop.f32.mrb[0].mxu0
      %v1201 = vpop.f32.mrb[0].mxu0
      %v1202 = vadd.f32 0.0, %v1201
      %v1203 = vpop.f32.mrb[0].mxu0
      %1204 = vmatprep.mubr.bf16.mxu0 %v929
      %1205 = vmatmul.mubr.bf16.gmra.mrb[0].mxu0 %v928
      %v1206 = vpop.f32.mrb[0].mxu0
      %v1207 = vadd.f32 0.0, %v1206
      %v1208 = vpop.f32.mrb[0].mxu0
      %v1209 = vpop.f32.mrb[0].mxu0
      %v1210 = vadd.f32 0.0, %v1209
      %v1211 = vpop.f32.mrb[0].mxu0
      %1212 = vmatprep.mubr.bf16.mxu0 %v931
      %1213 = vmatmul.mubr.bf16.gmra.mrb[0].mxu0 %v930
      %v1214 = vpop.f32.mrb[0].mxu0
      %v1215 = vadd.f32 0.0, %v1214
      %v1216 = vpop.f32.mrb[0].mxu0
      %v1217 = vpop.f32.mrb[0].mxu0
      %v1218 = vadd.f32 0.0, %v1217
      %v1219 = vpop.f32.mrb[0].mxu0
      %1220 = vdwg.mxu0
      %v1221 = vpack.c.bf16 %v1098, %v1095
      %v1222 = vpack.c.bf16 %v1106, %v1103
      %v1223 = vpack.c.bf16 %v1114, %v1111
      %v1224 = vpack.c.bf16 %v1122, %v1119
      %v1225 = vpack.c.bf16 %v1130, %v1127
      %v1226 = vpack.c.bf16 %v1138, %v1135
      %v1227 = vpack.c.bf16 %v1146, %v1143
      %v1228 = vpack.c.bf16 %v1154, %v1151
      %v1229 = vpack.c.bf16 %v1162, %v1159
      %v1230 = vpack.c.bf16 %v1170, %v1167
      %v1231 = vpack.c.bf16 %v1178, %v1175
      %v1232 = vpack.c.bf16 %v1186, %v1183
      %v1233 = vpack.c.bf16 %v1194, %v1191
      %v1234 = vpack.c.bf16 %v1202, %v1199
      %v1235 = vpack.c.bf16 %v1210, %v1207
      %v1236 = vpack.c.bf16 %v1218, %v1215
      %v1253 = vunpack.c.l.b16 %v1221
      %v1254 = vunpack.c.h.b16 %v1221
      %v1255 = vunpack.c.l.b16 %v1222
      %v1256 = vunpack.c.h.b16 %v1222
      %v1257 = vunpack.c.l.b16 %v1223
      %v1258 = vunpack.c.h.b16 %v1223
      %v1259 = vunpack.c.l.b16 %v1224
      %v1260 = vunpack.c.h.b16 %v1224
      %v1261 = vunpack.c.l.b16 %v1225
      %v1262 = vunpack.c.h.b16 %v1225
      %v1263 = vunpack.c.l.b16 %v1226
      %v1264 = vunpack.c.h.b16 %v1226
      %v1265 = vunpack.c.l.b16 %v1227
      %v1266 = vunpack.c.h.b16 %v1227
      %v1267 = vunpack.c.l.b16 %v1228
      %v1268 = vunpack.c.h.b16 %v1228
      %v1269 = vunpack.c.l.b16 %v1229
      %v1270 = vunpack.c.h.b16 %v1229
      %v1271 = vunpack.c.l.b16 %v1230
      %v1272 = vunpack.c.h.b16 %v1230
      %v1273 = vunpack.c.l.b16 %v1231
      %v1274 = vunpack.c.h.b16 %v1231
      %v1275 = vunpack.c.l.b16 %v1232
      %v1276 = vunpack.c.h.b16 %v1232
      %v1277 = vunpack.c.l.b16 %v1233
      %v1278 = vunpack.c.h.b16 %v1233
      %v1279 = vunpack.c.l.b16 %v1234
      %v1280 = vunpack.c.h.b16 %v1234
      %v1281 = vunpack.c.l.b16 %v1235
      %v1282 = vunpack.c.h.b16 %v1235
      %v1283 = vunpack.c.l.b16 %v1236
      %v1284 = vunpack.c.h.b16 %v1236
      %v1285 = vpack.c.b16 %v1253, %v1253
      %v1286 = vpack.c.b16 %v1254, %v1254
      %v1287 = vpack.c.b16 %v1255, %v1255
      %v1288 = vpack.c.b16 %v1256, %v1256
      %v1289 = vpack.c.b16 %v1257, %v1257
      %v1290 = vpack.c.b16 %v1258, %v1258
      %v1291 = vpack.c.b16 %v1259, %v1259
      %v1292 = vpack.c.b16 %v1260, %v1260
      %v1293 = vpack.c.b16 %v1261, %v1261
      %v1294 = vpack.c.b16 %v1262, %v1262
      %v1295 = vpack.c.b16 %v1263, %v1263
      %v1296 = vpack.c.b16 %v1264, %v1264
      %v1297 = vpack.c.b16 %v1265, %v1265
      %v1298 = vpack.c.b16 %v1266, %v1266
      %v1299 = vpack.c.b16 %v1267, %v1267
      %v1300 = vpack.c.b16 %v1268, %v1268
      %v1301 = vpack.c.b16 %v1269, %v1269
      %v1302 = vpack.c.b16 %v1270, %v1270
      %v1303 = vpack.c.b16 %v1271, %v1271
      %v1304 = vpack.c.b16 %v1272, %v1272
      %v1305 = vpack.c.b16 %v1273, %v1273
      %v1306 = vpack.c.b16 %v1274, %v1274
      %v1307 = vpack.c.b16 %v1275, %v1275
      %v1308 = vpack.c.b16 %v1276, %v1276
      %v1309 = vpack.c.b16 %v1277, %v1277
      %v1310 = vpack.c.b16 %v1278, %v1278
      %v1311 = vpack.c.b16 %v1279, %v1279
      %v1312 = vpack.c.b16 %v1280, %v1280
      %v1313 = vpack.c.b16 %v1281, %v1281
      %v1314 = vpack.c.b16 %v1282, %v1282
      %v1315 = vpack.c.b16 %v1283, %v1283
      %v1316 = vpack.c.b16 %v1284, %v1284
      %1349 = vst [vmem:[%s260] sm:$0xf] %v1285
      %1350 = vst [vmem:[%s260 + $0x4] sm:$0xf] %v1286
      %1351 = vst [vmem:[%s260 + $0x8] sm:$0xf] %v1287
      %1352 = vst [vmem:[%s260 + $0xc] sm:$0xf] %v1288
      %1353 = vst [vmem:[%s260 + $0x10] sm:$0xf] %v1289
      %1354 = vst [vmem:[%s260 + $0x14] sm:$0xf] %v1290
      %1355 = vst [vmem:[%s260 + $0x18] sm:$0xf] %v1291
      %1356 = vst [vmem:[%s260 + $0x1c] sm:$0xf] %v1292
      %1357 = vst [vmem:[%s260 + $0x20] sm:$0xf] %v1293
      %1358 = vst [vmem:[%s260 + $0x24] sm:$0xf] %v1294
      %1359 = vst [vmem:[%s260 + $0x28] sm:$0xf] %v1295
      %1360 = vst [vmem:[%s260 + $0x2c] sm:$0xf] %v1296
      %1361 = vst [vmem:[%s260 + $0x30] sm:$0xf] %v1297
      %1362 = vst [vmem:[%s260 + $0x34] sm:$0xf] %v1298
      %1363 = vst [vmem:[%s260 + $0x38] sm:$0xf] %v1299
      %1364 = vst [vmem:[%s260 + $0x3c] sm:$0xf] %v1300
      %1365 = vst [vmem:[%s260 + $0x40] sm:$0xf] %v1301
      %1366 = vst [vmem:[%s260 + $0x44] sm:$0xf] %v1302
      %1367 = vst [vmem:[%s260 + $0x48] sm:$0xf] %v1303
      %1368 = vst [vmem:[%s260 + $0x4c] sm:$0xf] %v1304
      %1369 = vst [vmem:[%s260 + $0x50] sm:$0xf] %v1305
      %1370 = vst [vmem:[%s260 + $0x54] sm:$0xf] %v1306
      %1371 = vst [vmem:[%s260 + $0x58] sm:$0xf] %v1307
      %1372 = vst [vmem:[%s260 + $0x5c] sm:$0xf] %v1308
      %1373 = vst [vmem:[%s260 + $0x60] sm:$0xf] %v1309
      %1374 = vst [vmem:[%s260 + $0x64] sm:$0xf] %v1310
      %1375 = vst [vmem:[%s260 + $0x68] sm:$0xf] %v1311
      %1376 = vst [vmem:[%s260 + $0x6c] sm:$0xf] %v1312
      %1377 = vst [vmem:[%s260 + $0x70] sm:$0xf] %v1313
      %1378 = vst [vmem:[%s260 + $0x74] sm:$0xf] %v1314
      %1379 = vst [vmem:[%s260 + $0x78] sm:$0xf] %v1315
      %1380 = vst [vmem:[%s260 + $0x7c] sm:$0xf] %v1316
      %v1381 = vadd.f32 %v1095, %v1098
      %v1382 = vadd.f32 %v1381, %v1103
      %v1383 = vadd.f32 %v1382, %v1106
      %v1384 = vadd.f32 %v1383, %v1111
      %v1385 = vadd.f32 %v1384, %v1114
      %v1386 = vadd.f32 %v1385, %v1119
      %v1387 = vadd.f32 %v1386, %v1122
      %v1388 = vadd.f32 %v1387, %v1127
      %v1389 = vadd.f32 %v1388, %v1130
      %v1390 = vadd.f32 %v1389, %v1135
      %v1391 = vadd.f32 %v1390, %v1138
      %v1392 = vadd.f32 %v1391, %v1143
      %v1393 = vadd.f32 %v1392, %v1146
      %v1394 = vadd.f32 %v1393, %v1151
      %v1395 = vadd.f32 %v1394, %v1154
      %v1396 = vadd.f32 %v1395, %v1159
      %v1397 = vadd.f32 %v1396, %v1162
      %v1398 = vadd.f32 %v1397, %v1167
      %v1399 = vadd.f32 %v1398, %v1170
      %v1400 = vadd.f32 %v1399, %v1175
      %v1401 = vadd.f32 %v1400, %v1178
      %v1402 = vadd.f32 %v1401, %v1183
      %v1403 = vadd.f32 %v1402, %v1186
      %v1404 = vadd.f32 %v1403, %v1191
      %v1405 = vadd.f32 %v1404, %v1194
      %v1406 = vadd.f32 %v1405, %v1199
      %v1407 = vadd.f32 %v1406, %v1202
      %v1408 = vadd.f32 %v1407, %v1207
      %v1409 = vadd.f32 %v1408, %v1210
      %v1410 = vadd.f32 %v1409, %v1215
      %v1411 = vadd.f32 %v1410, %v1218
      %v1412 = vrot.slane %v1411, 4
      %v1413 = vadd.f32 %v1411, %v1412
      %v1414 = vrot.slane %v1413, 2
      %v1415 = vadd.f32 %v1413, %v1414
      %v1416 = vrot.slane %v1415, 1
      %v1417 = vadd.f32 %v1415, %v1416
      %v1418 = vmul.f32 %v1095, %v1095
      %v1419 = vmul.f32 %v1098, %v1098
      %v1420 = vmul.f32 %v1103, %v1103
      %v1421 = vmul.f32 %v1106, %v1106
      %v1422 = vmul.f32 %v1111, %v1111
      %v1423 = vmul.f32 %v1114, %v1114
      %v1424 = vmul.f32 %v1119, %v1119
      %v1425 = vmul.f32 %v1122, %v1122
      %v1426 = vmul.f32 %v1127, %v1127
      %v1427 = vmul.f32 %v1130, %v1130
      %v1428 = vmul.f32 %v1135, %v1135
      %v1429 = vmul.f32 %v1138, %v1138
      %v1430 = vmul.f32 %v1143, %v1143
      %v1431 = vmul.f32 %v1146, %v1146
      %v1432 = vmul.f32 %v1151, %v1151
      %v1433 = vmul.f32 %v1154, %v1154
      %v1434 = vmul.f32 %v1159, %v1159
      %v1435 = vmul.f32 %v1162, %v1162
      %v1436 = vmul.f32 %v1167, %v1167
      %v1437 = vmul.f32 %v1170, %v1170
      %v1438 = vmul.f32 %v1175, %v1175
      %v1439 = vmul.f32 %v1178, %v1178
      %v1440 = vmul.f32 %v1183, %v1183
      %v1441 = vmul.f32 %v1186, %v1186
      %v1442 = vmul.f32 %v1191, %v1191
      %v1443 = vmul.f32 %v1194, %v1194
      %v1444 = vmul.f32 %v1199, %v1199
      %v1445 = vmul.f32 %v1202, %v1202
      %v1446 = vmul.f32 %v1207, %v1207
      %v1447 = vmul.f32 %v1210, %v1210
      %v1448 = vmul.f32 %v1215, %v1215
      %v1449 = vmul.f32 %v1218, %v1218
      %v1450 = vadd.f32 %v1418, %v1419
      %v1451 = vadd.f32 %v1450, %v1420
      %v1452 = vadd.f32 %v1451, %v1421
      %v1453 = vadd.f32 %v1452, %v1422
      %v1454 = vadd.f32 %v1453, %v1423
      %v1455 = vadd.f32 %v1454, %v1424
      %v1456 = vadd.f32 %v1455, %v1425
      %v1457 = vadd.f32 %v1456, %v1426
      %v1458 = vadd.f32 %v1457, %v1427
      %v1459 = vadd.f32 %v1458, %v1428
      %v1460 = vadd.f32 %v1459, %v1429
      %v1461 = vadd.f32 %v1460, %v1430
      %v1462 = vadd.f32 %v1461, %v1431
      %v1463 = vadd.f32 %v1462, %v1432
      %v1464 = vadd.f32 %v1463, %v1433
      %v1465 = vadd.f32 %v1464, %v1434
      %v1466 = vadd.f32 %v1465, %v1435
      %v1467 = vadd.f32 %v1466, %v1436
      %v1468 = vadd.f32 %v1467, %v1437
      %v1469 = vadd.f32 %v1468, %v1438
      %v1470 = vadd.f32 %v1469, %v1439
      %v1471 = vadd.f32 %v1470, %v1440
      %v1472 = vadd.f32 %v1471, %v1441
      %v1473 = vadd.f32 %v1472, %v1442
      %v1474 = vadd.f32 %v1473, %v1443
      %v1475 = vadd.f32 %v1474, %v1444
      %v1476 = vadd.f32 %v1475, %v1445
      %v1477 = vadd.f32 %v1476, %v1446
      %v1478 = vadd.f32 %v1477, %v1447
      %v1479 = vadd.f32 %v1478, %v1448
      %v1480 = vadd.f32 %v1479, %v1449
      %v1481 = vrot.slane %v1480, 4
      %v1482 = vadd.f32 %v1480, %v1481
      %v1483 = vrot.slane %v1482, 2
      %v1484 = vadd.f32 %v1482, %v1483
      %v1485 = vrot.slane %v1484, 1
      %v1486 = vadd.f32 %v1484, %v1485
      %vm1487 = vcmask 1040384
      %v1488 = vsel %vm1487, %v1417, %v1486
      %1489 = vst [vmem:[%s265] sm:$0x3] %v1488
      %s1490 = smul.u32 32, %s18
      %p1491 = scmp.lt.s32.totalorder %s1490, 63
      %s1492 = scalar_select %p1491, %s1490, 63
      %s1493 = smul.addr %s1492, 4
      %s1494 = scalar_lea.vmem %s5, %s1493
      %p1495 = scmp.lt.s32.totalorder %s18, 1
      %s1496 = scalar_select %p1495, %s18, 1
      %s1497 = smul.addr %s1496, 2
      %s1498 = scalar_lea.vmem %s6, %s1497
      // Predicated region
      $region41: #{apply_node_func.4} parent=39 // pred_check
        %p1499 = pneg %p146
      $region42: #{apply_node_func.4} parent=39 // pred_check_branch
        %1501 = sbr.rel (%p1499) target = $region44
      $region43: #{apply_node_func.4} parent=39 // pred_region
        %s1502 = smul.u32 32, %s18
      $region44: #{apply_node_func.4} parent=39 // pred_fallthru
        _
      // Predicated region
      $region45: #{apply_node_func.4} parent=39 // pred_check
        %p1503 = pneg %p172
      $region46: #{apply_node_func.4} parent=39 // pred_check_branch
        %1505 = sbr.rel (%p1503) target = $region48
      $region47: #{apply_node_func.4} parent=39 // pred_region
        _
      $region48: #{apply_node_func.4} parent=39 // pred_fallthru
        _
    $region40: #{apply_node_func.4} parent=5 // pred_fallthru
      _
    %p1506 = scmp.le.s32.totalorder 2, %s13
    // Predicated region
    $region49: #{apply_node_func.4} parent=5 // pred_check
      %p1507 = pneg %p1506
    $region50: #{apply_node_func.4} parent=5 // pred_check_branch
      %1509 = sbr.rel (%p1507) target = $region52
    $region51: #{apply_node_func.4} parent=5 // pred_region
      %s1510 = ssub.s32 %s13, 2
      // Predicated region
      $region53: #{apply_node_func.4} parent=51 // pred_check
        %p1511 = pneg %p152
      $region54: #{apply_node_func.4} parent=51 // pred_check_branch
        %1513 = sbr.rel (%p1511) target = $region56
      $region55: #{apply_node_func.4} parent=51 // pred_region
        %s1514 = smul.u32 32, %s19
        %p1515 = scmp.lt.s32.totalorder %s1514, 63
        %s1516 = scalar_select %p1515, %s1514, 63
        %s1517 = smul.addr %s1516, 4
        %s1518 = scalar_lea.vmem %s5, %s1517
      $region56: #{apply_node_func.4} parent=51 // pred_fallthru
        _
      // Predicated region
      $region57: #{apply_node_func.4} parent=51 // pred_check
        %p1519 = pneg %p178
      $region58: #{apply_node_func.4} parent=51 // pred_check_branch
        %1521 = sbr.rel (%p1519) target = $region60
      $region59: #{apply_node_func.4} parent=51 // pred_region
        %p1522 = scmp.lt.s32.totalorder %s19, 1
        %s1523 = scalar_select %p1522, %s19, 1
        %s1524 = smul.addr %s1523, 2
        %s1525 = scalar_lea.vmem %s6, %s1524
      $region60: #{apply_node_func.4} parent=51 // pred_fallthru
        _
    $region52: #{apply_node_func.4} parent=5 // pred_fallthru
      _
  $region6: #{apply_node_func.4} parent=0 // loop_footer
    %s17 = sadd.s32 1, %s13
  $region7: #{apply_node_func.4} parent=0 // loop_footer_branch
    %12 = sbr.rel target = $region3
  $region8: #{apply_node_func.4} parent=0 // loop_exit
    _

</llo_original>
